<compile_context>
chip_gen: v5e
topology: v5e:2x2
jax: 0.10.0
libtpu: 0.0.40
codegen_flags: <defaults>
</compile_context>

<pallas_src>
import math

import jax
import jax.numpy as jnp
from jax.experimental import pallas as pl
from jax.experimental.pallas import tpu as pltpu

ROWS = 136          # hardcoded in the PyTorch forward (x.reshape(136, -1))
COLS = 256          # free "cols" dimension of the gate for the example below
MAX_COL_TILE = 2048 # caps per-step VMEM footprint (~9 MiB double-buffered)


def _round_up(x, m):
    return ((x + m - 1) // m) * m


def _make_gate_kernel(activation):
    def kernel(w_ref, u_ref, x_ref, h_ref, b_ref, o_ref):
        # Two accumulating MXU contractions, f32 accumulation throughout.
        pre = jnp.dot(w_ref[...], x_ref[...], preferred_element_type=jnp.float32)
        pre = pre + jnp.dot(u_ref[...], h_ref[...], preferred_element_type=jnp.float32)
        pre = pre + b_ref[...].astype(jnp.float32)
        o_ref[...] = activation(pre).astype(o_ref.dtype)

    return kernel


def _pick_col_tile(cols):
    """Largest lane-aligned column tile (<= MAX_COL_TILE).

    Prefers an even number of grid steps whenever there are >= 2 steps, so the
    "parallel" grid axis splits evenly across v7x's two TensorCores.  Ragged
    tails are handled by Pallas' masked stores (K = 136 is never padded, so
    the math stays exact).
    """
    if cols <= 128:
        return cols                                  # single full-extent block
    tc = min((cols // 128) * 128, MAX_COL_TILE)      # lane-aligned, <= cols
    steps = pl.cdiv(cols, tc)
    if steps > 1 and steps % 2 == 1:
        tc_even = _round_up(pl.cdiv(cols, steps + 1), 128)
        if 128 <= tc_even <= cols and pl.cdiv(cols, tc_even) % 2 == 0:
            tc = tc_even
    return tc


def mat_lstm_gate_2(W, U, bias, x, hidden, activation=jax.nn.sigmoid,
                    out_dtype=jnp.float32):
    """Pallas implementation of mat_LSTM_gate_2.forward."""
    # Glue: the PyTorch module reshapes x to (136, -1).  A contiguous reshape
    # is metadata-only (no HBM round trip).
    x2 = x.reshape(ROWS, -1)
    cols = x2.shape[1]
    assert hidden.shape == (ROWS, cols)
    assert bias.shape == (ROWS, cols)

    W = W.astype(jnp.float32)
    U = U.astype(jnp.float32)
    x2 = x2.astype(jnp.float32)
    hidden = hidden.astype(jnp.float32)
    bias = bias.astype(jnp.float32)

    tc = _pick_col_tile(cols)
    grid = (pl.cdiv(cols, tc),)

    out_itemsize = jnp.dtype(out_dtype).itemsize
    bytes_accessed = (2 * ROWS * ROWS + 3 * ROWS * cols) * 4 + ROWS * cols * out_itemsize
    flops = 4 * ROWS * ROWS * cols + 2 * ROWS * cols

    return pl.pallas_call(
        _make_gate_kernel(activation),
        out_shape=jax.ShapeDtypeStruct((ROWS, cols), out_dtype),
        grid=grid,
        in_specs=[
            # Weights: constant index_map -> VMEM-resident across column tiles
            # (no re-DMA per grid step).
            pl.BlockSpec((ROWS, ROWS), lambda j: (0, 0)),   # W
            pl.BlockSpec((ROWS, ROWS), lambda j: (0, 0)),   # U
            # Column-tiled activations / bias, sharing the column index_map.
            pl.BlockSpec((ROWS, tc), lambda j: (0, j)),     # x2
            pl.BlockSpec((ROWS, tc), lambda j: (0, j)),     # hidden
            pl.BlockSpec((ROWS, tc), lambda j: (0, j)),     # bias
        ],
        out_specs=pl.BlockSpec((ROWS, tc), lambda j: (0, j)),
        compiler_params=pltpu.CompilerParams(
            dimension_semantics=("parallel",),
            # Explicit scoped-VMEM budget: worst case (tc=2048, double-
            # buffered x/h/bias/out + resident weights) is ~9 MiB, well under
            # this limit on v5e/v6e (128 MiB) and v7x (64 MiB physical).
            vmem_limit_bytes=32 * 1024 * 1024,
        ),
        cost_estimate=pl.CostEstimate(
            flops=flops,
            transcendentals=ROWS * cols,    # sigmoid -> one exp per element
            bytes_accessed=bytes_accessed,
        ),
    )(W, U, x2, hidden, bias)


def init_params(key, rows, cols):
    # Matches reset_param: uniform(-stdv, stdv), stdv = 1/sqrt(rows); bias zeros.
    stdv = 1.0 / math.sqrt(rows)
    kw, ku = jax.random.split(key)
    W = jax.random.uniform(kw, (rows, rows), jnp.float32, -stdv, stdv)
    U = jax.random.uniform(ku, (rows, rows), jnp.float32, -stdv, stdv)
    bias = jnp.zeros((rows, cols), jnp.float32)
    return W, U, bias


if __name__ == "__main__":
    key = jax.random.PRNGKey(0)
    kp, kx, kh = jax.random.split(key, 3)

    W, U, bias = init_params(kp, ROWS, COLS)

    # x can be any shape whose total size is 136 * COLS; the module reshapes it.
    x = jax.random.normal(kx, (8, 17, COLS), jnp.float32)       # 8*17 = 136
    hidden = jax.random.normal(kh, (ROWS, COLS), jnp.float32)

    gate = jax.jit(mat_lstm_gate_2)
    out = gate(W, U, bias, x, hidden)
    out = jax.block_until_ready(out)

    # Reference check in plain JAX (same math as the PyTorch forward, f32).
    x2 = x.reshape(ROWS, -1)
    ref = jax.nn.sigmoid(
        jnp.dot(W, x2, precision=jax.lax.Precision.HIGHEST)
        + jnp.dot(U, hidden, precision=jax.lax.Precision.HIGHEST)
        + bias
    )
    assert out.shape == (ROWS, COLS)
    assert out.dtype == jnp.float32
    # All-f32 path; tolerance only covers MXU accumulation-order differences.
    assert jnp.allclose(out, ref, atol=2e-3, rtol=2e-3)

    print("KERNEL_OK")
</pallas_src>

<mosaic_0001>
module attributes {stable_mosaic.version = 11 : i64} {
  func.func @kernel(%arg0: i32, %arg1: memref<136x136xf32, #tpu.memory_space<vmem>>, %arg2: memref<136x136xf32, #tpu.memory_space<vmem>>, %arg3: memref<136x256xf32, #tpu.memory_space<vmem>>, %arg4: memref<136x256xf32, #tpu.memory_space<vmem>>, %arg5: memref<136x256xf32, #tpu.memory_space<vmem>>, %arg6: memref<136x256xf32, #tpu.memory_space<vmem>>) attributes {dimension_semantics = [#tpu.dimension_semantics<parallel>], iteration_bounds = array<i64: 1>, scalar_prefetch = 0 : i64, scratch_operands = 0 : i64, tpu.core_type = #tpu.core_type<tc>, window_params = [{pipeline_mode = #tpu.pipeline_mode<synchronous>, transform_indices = @transform_0, window_bounds = array<i64: 136, 136>}, {pipeline_mode = #tpu.pipeline_mode<synchronous>, transform_indices = @transform_1, window_bounds = array<i64: 136, 136>}, {transform_indices = @transform_2, window_bounds = array<i64: 136, 256>}, {transform_indices = @transform_3, window_bounds = array<i64: 136, 256>}, {transform_indices = @transform_4, window_bounds = array<i64: 136, 256>}, {transform_indices = @transform_5, window_bounds = array<i64: 136, 256>}]} {
    %c0 = arith.constant 0 : index
    %c0_0 = arith.constant 0 : index
    %0 = vector.load %arg1[%c0, %c0_0] : memref<136x136xf32, #tpu.memory_space<vmem>>, vector<136x136xf32>
    %c0_1 = arith.constant 0 : index
    %c0_2 = arith.constant 0 : index
    %1 = vector.load %arg3[%c0_1, %c0_2] : memref<136x256xf32, #tpu.memory_space<vmem>>, vector<136x256xf32>
    %cst = arith.constant dense<0.000000e+00> : vector<136x256xf32>
    %2 = tpu.matmul %0, %1, %cst {dimension_numbers = #tpu.dot_dimension_numbers<[1], [0], [0], [1], [0, 0, 1, 1], [], []>} : vector<136x136xf32>, vector<136x256xf32>, vector<136x256xf32> -> vector<136x256xf32>
    %c0_3 = arith.constant 0 : index
    %c0_4 = arith.constant 0 : index
    %3 = vector.load %arg2[%c0_3, %c0_4] : memref<136x136xf32, #tpu.memory_space<vmem>>, vector<136x136xf32>
    %c0_5 = arith.constant 0 : index
    %c0_6 = arith.constant 0 : index
    %4 = vector.load %arg4[%c0_5, %c0_6] : memref<136x256xf32, #tpu.memory_space<vmem>>, vector<136x256xf32>
    %cst_7 = arith.constant dense<0.000000e+00> : vector<136x256xf32>
    %5 = tpu.matmul %3, %4, %cst_7 {dimension_numbers = #tpu.dot_dimension_numbers<[1], [0], [0], [1], [0, 0, 1, 1], [], []>} : vector<136x136xf32>, vector<136x256xf32>, vector<136x256xf32> -> vector<136x256xf32>
    %6 = arith.addf %2, %5 : vector<136x256xf32>
    %c0_8 = arith.constant 0 : index
    %c0_9 = arith.constant 0 : index
    %7 = vector.load %arg5[%c0_8, %c0_9] : memref<136x256xf32, #tpu.memory_space<vmem>>, vector<136x256xf32>
    %8 = arith.addf %6, %7 : vector<136x256xf32>
    %9 = arith.negf %8 : vector<136x256xf32>
    %10 = math.exp %9 : vector<136x256xf32>
    %cst_10 = arith.constant 1.000000e+00 : f32
    %11 = vector.broadcast %cst_10 : f32 to vector<136x256xf32>
    %12 = arith.addf %11, %10 : vector<136x256xf32>
    %13 = arith.divf %11, %12 : vector<136x256xf32>
    %c0_11 = arith.constant 0 : index
    %c0_12 = arith.constant 0 : index
    %14 = vector.load %arg6[%c0_11, %c0_12] : memref<136x256xf32, #tpu.memory_space<vmem>>, vector<136x256xf32>
    tpu.vector_store %arg6[%c0_11, %c0_12], %13 {strides = array<i32>} : memref<136x256xf32, #tpu.memory_space<vmem>>, vector<136x256xf32>,
    return
  }
  func.func @transform_0(%arg0: i32) -> (i32, i32) {
    %c0_i32 = arith.constant 0 : i32
    %c0_i32_0 = arith.constant 0 : i32
    %c0_i32_1 = arith.constant 0 : i32
    return %c0_i32, %c0_i32_0 : i32, i32
  }
  func.func @transform_1(%arg0: i32) -> (i32, i32) {
    %c0_i32 = arith.constant 0 : i32
    %c0_i32_0 = arith.constant 0 : i32
    %c0_i32_1 = arith.constant 0 : i32
    return %c0_i32, %c0_i32_0 : i32, i32
  }
  func.func @transform_2(%arg0: i32) -> (i32, i32) {
    %c0_i32 = arith.constant 0 : i32
    %c0_i32_0 = arith.constant 0 : i32
    return %c0_i32, %arg0 : i32, i32
  }
  func.func @transform_3(%arg0: i32) -> (i32, i32) {
    %c0_i32 = arith.constant 0 : i32
    %c0_i32_0 = arith.constant 0 : i32
    return %c0_i32, %arg0 : i32, i32
  }
  func.func @transform_4(%arg0: i32) -> (i32, i32) {
    %c0_i32 = arith.constant 0 : i32
    %c0_i32_0 = arith.constant 0 : i32
    return %c0_i32, %arg0 : i32, i32
  }
  func.func @transform_5(%arg0: i32) -> (i32, i32) {
    %c0_i32 = arith.constant 0 : i32
    %c0_i32_0 = arith.constant 0 : i32
    return %c0_i32, %arg0 : i32, i32
  }
}

</mosaic_0001>

<llo_original>
// kernel: mat_lstm_gate_2.1
$region0: #{mat_lstm_gate_2.1}
  #allocation0 [shape = 'u32[]', space=smem, size = 0x4, offset = 0x4, fixed_abs, tag = 'smem constant byte address 0x4 - core index']
  #allocation1 [shape = 'u32[72,128]{1,0:T(1,128)}', space=vmem, size = 0x9000, scoped, tag = 'internal scratch']
  %s0 = inlined_call_operand.vmem [shape: f32[136,136], index: 0, kind: input, shape index: {}]
  %s1 = inlined_call_operand.vmem [shape: f32[136,136], index: 1, kind: input, shape index: {}]
  %s2 = inlined_call_operand.vmem [shape: f32[136,256], index: 2, kind: input, shape index: {}]
  %s3 = inlined_call_operand.vmem [shape: f32[136,256], index: 3, kind: input, shape index: {}]
  %s4 = inlined_call_operand.vmem [shape: f32[136,256], index: 4, kind: input, shape index: {}]
  %s5 = inlined_call_operand.hbm [shape: f32[136,256], index: 5, kind: output, shape index: {}]
  %s6 = sld [smem:[#allocation0]]
  $region30: #{mat_lstm_gate_2.1} parent=0
    _
  %s8 = ssub.s32 1, %s6
  %s9 = scalar_select 0, %s8, %s6
  $region1: #{mat_lstm_gate_2.1} parent=0
    #allocation2 [shape = 'u8[139264]{0}', space=vmem, size = 0x22000, scoped, tag = 'output window, operand 0, single buffered']
    #allocation3 [shape = 's32[1]{0}', space=sflag, size = 0x4, scoped, tag = 'scoped memory for mat_lstm_gate_2.1']
    %10 = vsyncpa [#allocation3], 0
    // Predicated region
    $region2: #{mat_lstm_gate_2.1} parent=1 // pred_check
      _
    $region3: #{mat_lstm_gate_2.1} parent=1 // pred_check_branch
      %12 = sbr.rel (0) target = $region5
    $region4: #{mat_lstm_gate_2.1} parent=1 // pred_region
      _
    $region5: #{mat_lstm_gate_2.1} parent=1 // pred_fallthru
      _
    // Predicated region
    $region6: #{mat_lstm_gate_2.1} parent=1 // pred_check
      _
    $region7: #{mat_lstm_gate_2.1} parent=1 // pred_check_branch
      %14 = sbr.rel (0) target = $region9
    $region8: #{mat_lstm_gate_2.1} parent=1 // pred_region
      _
    $region9: #{mat_lstm_gate_2.1} parent=1 // pred_fallthru
      _
    // Predicated region
    $region10: #{mat_lstm_gate_2.1} parent=1 // pred_check
      _
    $region11: #{mat_lstm_gate_2.1} parent=1 // pred_check_branch
      %16 = sbr.rel (0) target = $region13
    $region12: #{mat_lstm_gate_2.1} parent=1 // pred_region
      _
    $region13: #{mat_lstm_gate_2.1} parent=1 // pred_fallthru
      _
    // Predicated region
    $region14: #{mat_lstm_gate_2.1} parent=1 // pred_check
      _
    $region15: #{mat_lstm_gate_2.1} parent=1 // pred_check_branch
      %18 = sbr.rel (0) target = $region17
    $region16: #{mat_lstm_gate_2.1} parent=1 // pred_region
      _
    $region17: #{mat_lstm_gate_2.1} parent=1 // pred_fallthru
      _
    // Predicated region
    $region18: #{mat_lstm_gate_2.1} parent=1 // pred_check
      _
    $region19: #{mat_lstm_gate_2.1} parent=1 // pred_check_branch
      %20 = sbr.rel (0) target = $region21
    $region20: #{mat_lstm_gate_2.1} parent=1 // pred_region
      _
    $region21: #{mat_lstm_gate_2.1} parent=1 // pred_fallthru
      _
    %v21 = vld [vmem:[%s0] sm:$0xff]
    %v22 = vld [vmem:[%s0 + $0x8] sm:$0xff]
    %v23 = vld [vmem:[%s0 + $0x10] sm:$0xff]
    %v24 = vld [vmem:[%s0 + $0x18] sm:$0xff]
    %v25 = vld [vmem:[%s0 + $0x20] sm:$0xff]
    %v26 = vld [vmem:[%s0 + $0x28] sm:$0xff]
    %v27 = vld [vmem:[%s0 + $0x30] sm:$0xff]
    %v28 = vld [vmem:[%s0 + $0x38] sm:$0xff]
    %v29 = vld [vmem:[%s0 + $0x40] sm:$0xff]
    %v30 = vld [vmem:[%s0 + $0x48] sm:$0xff]
    %v31 = vld [vmem:[%s0 + $0x50] sm:$0xff]
    %v32 = vld [vmem:[%s0 + $0x58] sm:$0xff]
    %v33 = vld [vmem:[%s0 + $0x60] sm:$0xff]
    %v34 = vld [vmem:[%s0 + $0x68] sm:$0xff]
    %v35 = vld [vmem:[%s0 + $0x70] sm:$0xff]
    %v36 = vld [vmem:[%s0 + $0x78] sm:$0xff]
    %v37 = vld [vmem:[%s0 + $0x80] sm:$0xff]
    %v38 = vld [vmem:[%s0 + $0x88] sm:$0xff]
    %v39 = vld [vmem:[%s0 + $0x90] sm:$0xff]
    %v40 = vld [vmem:[%s0 + $0x98] sm:$0xff]
    %v41 = vld [vmem:[%s0 + $0xa0] sm:$0xff]
    %v42 = vld [vmem:[%s0 + $0xa8] sm:$0xff]
    %v43 = vld [vmem:[%s0 + $0xb0] sm:$0xff]
    %v44 = vld [vmem:[%s0 + $0xb8] sm:$0xff]
    %v45 = vld [vmem:[%s0 + $0xc0] sm:$0xff]
    %v46 = vld [vmem:[%s0 + $0xc8] sm:$0xff]
    %v47 = vld [vmem:[%s0 + $0xd0] sm:$0xff]
    %v48 = vld [vmem:[%s0 + $0xd8] sm:$0xff]
    %v49 = vld [vmem:[%s0 + $0xe0] sm:$0xff]
    %v50 = vld [vmem:[%s0 + $0xe8] sm:$0xff]
    %v51 = vld [vmem:[%s0 + $0xf0] sm:$0xff]
    %v52 = vld [vmem:[%s0 + $0xf8] sm:$0xff]
    %v53 = vld [vmem:[%s0 + $0x100] sm:$0xff]
    %v54 = vld [vmem:[%s0 + $0x108] sm:$0xff]
    %v55 = vld [vmem:[%s2] sm:$0xff]
    %v56 = vld [vmem:[%s2 + $0x8] sm:$0xff]
    %v57 = vld [vmem:[%s2 + $0x10] sm:$0xff]
    %v58 = vld [vmem:[%s2 + $0x18] sm:$0xff]
    %v59 = vld [vmem:[%s2 + $0x20] sm:$0xff]
    %v60 = vld [vmem:[%s2 + $0x28] sm:$0xff]
    %v61 = vld [vmem:[%s2 + $0x30] sm:$0xff]
    %v62 = vld [vmem:[%s2 + $0x38] sm:$0xff]
    %v63 = vld [vmem:[%s2 + $0x40] sm:$0xff]
    %v64 = vld [vmem:[%s2 + $0x48] sm:$0xff]
    %v65 = vld [vmem:[%s2 + $0x50] sm:$0xff]
    %v66 = vld [vmem:[%s2 + $0x58] sm:$0xff]
    %v67 = vld [vmem:[%s2 + $0x60] sm:$0xff]
    %v68 = vld [vmem:[%s2 + $0x68] sm:$0xff]
    %v69 = vld [vmem:[%s2 + $0x70] sm:$0xff]
    %v70 = vld [vmem:[%s2 + $0x78] sm:$0xff]
    %v71 = vld [vmem:[%s2 + $0x80] sm:$0xff]
    %v72 = vld [vmem:[%s2 + $0x88] sm:$0xff]
    %v73 = vld [vmem:[%s2 + $0x90] sm:$0xff]
    %v74 = vld [vmem:[%s2 + $0x98] sm:$0xff]
    %v75 = vld [vmem:[%s2 + $0xa0] sm:$0xff]
    %v76 = vld [vmem:[%s2 + $0xa8] sm:$0xff]
    %v77 = vld [vmem:[%s2 + $0xb0] sm:$0xff]
    %v78 = vld [vmem:[%s2 + $0xb8] sm:$0xff]
    %v79 = vld [vmem:[%s2 + $0xc0] sm:$0xff]
    %v80 = vld [vmem:[%s2 + $0xc8] sm:$0xff]
    %v81 = vld [vmem:[%s2 + $0xd0] sm:$0xff]
    %v82 = vld [vmem:[%s2 + $0xd8] sm:$0xff]
    %v83 = vld [vmem:[%s2 + $0xe0] sm:$0xff]
    %v84 = vld [vmem:[%s2 + $0xe8] sm:$0xff]
    %v85 = vld [vmem:[%s2 + $0xf0] sm:$0xff]
    %v86 = vld [vmem:[%s2 + $0xf8] sm:$0xff]
    %v87 = vld [vmem:[%s2 + $0x100] sm:$0xff]
    %v88 = vld [vmem:[%s2 + $0x108] sm:$0xff]
    %v89 = vld [vmem:[%s1] sm:$0xff]
    %v90 = vld [vmem:[%s1 + $0x8] sm:$0xff]
    %v91 = vld [vmem:[%s1 + $0x10] sm:$0xff]
    %v92 = vld [vmem:[%s1 + $0x18] sm:$0xff]
    %v93 = vld [vmem:[%s1 + $0x20] sm:$0xff]
    %v94 = vld [vmem:[%s1 + $0x28] sm:$0xff]
    %v95 = vld [vmem:[%s1 + $0x30] sm:$0xff]
    %v96 = vld [vmem:[%s1 + $0x38] sm:$0xff]
    %v97 = vld [vmem:[%s1 + $0x40] sm:$0xff]
    %v98 = vld [vmem:[%s1 + $0x48] sm:$0xff]
    %v99 = vld [vmem:[%s1 + $0x50] sm:$0xff]
    %v100 = vld [vmem:[%s1 + $0x58] sm:$0xff]
    %v101 = vld [vmem:[%s1 + $0x60] sm:$0xff]
    %v102 = vld [vmem:[%s1 + $0x68] sm:$0xff]
    %v103 = vld [vmem:[%s1 + $0x70] sm:$0xff]
    %v104 = vld [vmem:[%s1 + $0x78] sm:$0xff]
    %v105 = vld [vmem:[%s1 + $0x80] sm:$0xff]
    %v106 = vld [vmem:[%s1 + $0x88] sm:$0xff]
    %v107 = vld [vmem:[%s1 + $0x90] sm:$0xff]
    %v108 = vld [vmem:[%s1 + $0x98] sm:$0xff]
    %v109 = vld [vmem:[%s1 + $0xa0] sm:$0xff]
    %v110 = vld [vmem:[%s1 + $0xa8] sm:$0xff]
    %v111 = vld [vmem:[%s1 + $0xb0] sm:$0xff]
    %v112 = vld [vmem:[%s1 + $0xb8] sm:$0xff]
    %v113 = vld [vmem:[%s1 + $0xc0] sm:$0xff]
    %v114 = vld [vmem:[%s1 + $0xc8] sm:$0xff]
    %v115 = vld [vmem:[%s1 + $0xd0] sm:$0xff]
    %v116 = vld [vmem:[%s1 + $0xd8] sm:$0xff]
    %v117 = vld [vmem:[%s1 + $0xe0] sm:$0xff]
    %v118 = vld [vmem:[%s1 + $0xe8] sm:$0xff]
    %v119 = vld [vmem:[%s1 + $0xf0] sm:$0xff]
    %v120 = vld [vmem:[%s1 + $0xf8] sm:$0xff]
    %v121 = vld [vmem:[%s1 + $0x100] sm:$0xff]
    %v122 = vld [vmem:[%s1 + $0x108] sm:$0xff]
    %v123 = vld [vmem:[%s3] sm:$0xff]
    %v124 = vld [vmem:[%s3 + $0x8] sm:$0xff]
    %v125 = vld [vmem:[%s3 + $0x10] sm:$0xff]
    %v126 = vld [vmem:[%s3 + $0x18] sm:$0xff]
    %v127 = vld [vmem:[%s3 + $0x20] sm:$0xff]
    %v128 = vld [vmem:[%s3 + $0x28] sm:$0xff]
    %v129 = vld [vmem:[%s3 + $0x30] sm:$0xff]
    %v130 = vld [vmem:[%s3 + $0x38] sm:$0xff]
    %v131 = vld [vmem:[%s3 + $0x40] sm:$0xff]
    %v132 = vld [vmem:[%s3 + $0x48] sm:$0xff]
    %v133 = vld [vmem:[%s3 + $0x50] sm:$0xff]
    %v134 = vld [vmem:[%s3 + $0x58] sm:$0xff]
    %v135 = vld [vmem:[%s3 + $0x60] sm:$0xff]
    %v136 = vld [vmem:[%s3 + $0x68] sm:$0xff]
    %v137 = vld [vmem:[%s3 + $0x70] sm:$0xff]
    %v138 = vld [vmem:[%s3 + $0x78] sm:$0xff]
    %v139 = vld [vmem:[%s3 + $0x80] sm:$0xff]
    %v140 = vld [vmem:[%s3 + $0x88] sm:$0xff]
    %v141 = vld [vmem:[%s3 + $0x90] sm:$0xff]
    %v142 = vld [vmem:[%s3 + $0x98] sm:$0xff]
    %v143 = vld [vmem:[%s3 + $0xa0] sm:$0xff]
    %v144 = vld [vmem:[%s3 + $0xa8] sm:$0xff]
    %v145 = vld [vmem:[%s3 + $0xb0] sm:$0xff]
    %v146 = vld [vmem:[%s3 + $0xb8] sm:$0xff]
    %v147 = vld [vmem:[%s3 + $0xc0] sm:$0xff]
    %v148 = vld [vmem:[%s3 + $0xc8] sm:$0xff]
    %v149 = vld [vmem:[%s3 + $0xd0] sm:$0xff]
    %v150 = vld [vmem:[%s3 + $0xd8] sm:$0xff]
    %v151 = vld [vmem:[%s3 + $0xe0] sm:$0xff]
    %v152 = vld [vmem:[%s3 + $0xe8] sm:$0xff]
    %v153 = vld [vmem:[%s3 + $0xf0] sm:$0xff]
    %v154 = vld [vmem:[%s3 + $0xf8] sm:$0xff]
    %v155 = vld [vmem:[%s3 + $0x100] sm:$0xff]
    %v156 = vld [vmem:[%s3 + $0x108] sm:$0xff]
    %vm157 = vcmask 64512
    %v159 = vsel %vm157, %v90, 0
    %v162 = vsel %vm157, %v92, 0
    %v165 = vsel %vm157, %v94, 0
    %v168 = vsel %vm157, %v96, 0
    %v171 = vsel %vm157, %v98, 0
    %v174 = vsel %vm157, %v100, 0
    %v177 = vsel %vm157, %v102, 0
    %v180 = vsel %vm157, %v104, 0
    %v183 = vsel %vm157, %v106, 0
    %v186 = vsel %vm157, %v108, 0
    %v189 = vsel %vm157, %v110, 0
    %v192 = vsel %vm157, %v112, 0
    %v195 = vsel %vm157, %v114, 0
    %v198 = vsel %vm157, %v116, 0
    %v201 = vsel %vm157, %v118, 0
    %v204 = vsel %vm157, %v120, 0
    %v207 = vsel %vm157, %v122, 0
    %209 = vmatpush.msra.mxu0 %v153
    %210 = vmatpush.msra.mxu0 %v151
    %211 = vmatpush.msra.mxu0 %v149
    %212 = vmatpush.msra.mxu0 %v147
    %213 = vmatpush.msra.mxu0 %v145
    %214 = vmatpush.msra.mxu0 %v143
    %215 = vmatpush.msra.mxu0 %v141
    %216 = vmatpush.msra.mxu0 %v139
    %217 = vmatpush.msra.mxu0 %v137
    %218 = vmatpush.msra.mxu0 %v135
    %219 = vmatpush.msra.mxu0 %v133
    %220 = vmatpush.msra.mxu0 %v131
    %221 = vmatpush.msra.mxu0 %v129
    %222 = vmatpush.msra.mxu0 %v127
    %223 = vmatpush.msra.mxu0 %v125
    %224 = vmatpush.msra.mxu0 %v123
    %225 = vmatmul.f32.gmra.mxu0 %v89
    %v226 = vpop.f32.mrf.mxu0
    %v227 = vadd.f32 0.0, %v226
    %228 = vmatmul.f32.gmra.mxu0 %v91
    %v229 = vpop.f32.mrf.mxu0
    %v230 = vadd.f32 0.0, %v229
    %231 = vmatmul.f32.gmra.mxu0 %v93
    %v232 = vpop.f32.mrf.mxu0
    %v233 = vadd.f32 0.0, %v232
    %234 = vmatmul.f32.gmra.mxu0 %v95
    %v235 = vpop.f32.mrf.mxu0
    %v236 = vadd.f32 0.0, %v235
    %237 = vmatmul.f32.gmra.mxu0 %v97
    %v238 = vpop.f32.mrf.mxu0
    %v239 = vadd.f32 0.0, %v238
    %240 = vmatmul.f32.gmra.mxu0 %v99
    %v241 = vpop.f32.mrf.mxu0
    %v242 = vadd.f32 0.0, %v241
    %243 = vmatmul.f32.gmra.mxu0 %v101
    %v244 = vpop.f32.mrf.mxu0
    %v245 = vadd.f32 0.0, %v244
    %246 = vmatmul.f32.gmra.mxu0 %v103
    %v247 = vpop.f32.mrf.mxu0
    %v248 = vadd.f32 0.0, %v247
    %249 = vmatmul.f32.gmra.mxu0 %v105
    %v250 = vpop.f32.mrf.mxu0
    %v251 = vadd.f32 0.0, %v250
    %252 = vmatmul.f32.gmra.mxu0 %v107
    %v253 = vpop.f32.mrf.mxu0
    %v254 = vadd.f32 0.0, %v253
    %255 = vmatmul.f32.gmra.mxu0 %v109
    %v256 = vpop.f32.mrf.mxu0
    %v257 = vadd.f32 0.0, %v256
    %258 = vmatmul.f32.gmra.mxu0 %v111
    %v259 = vpop.f32.mrf.mxu0
    %v260 = vadd.f32 0.0, %v259
    %261 = vmatmul.f32.gmra.mxu0 %v113
    %v262 = vpop.f32.mrf.mxu0
    %v263 = vadd.f32 0.0, %v262
    %264 = vmatmul.f32.gmra.mxu0 %v115
    %v265 = vpop.f32.mrf.mxu0
    %v266 = vadd.f32 0.0, %v265
    %267 = vmatmul.f32.gmra.mxu0 %v117
    %v268 = vpop.f32.mrf.mxu0
    %v269 = vadd.f32 0.0, %v268
    %270 = vmatmul.f32.gmra.mxu0 %v119
    %v271 = vpop.f32.mrf.mxu0
    %v272 = vadd.f32 0.0, %v271
    %273 = vmatmul.f32.gmra.mxu0 %v121
    %v274 = vpop.f32.mrf.mxu0
    %v275 = vadd.f32 0.0, %v274
    %276 = vdwg.mxu0
    %277 = vmatpush.msra.mxu0 0.0
    %278 = vmatpush.msra.mxu0 0.0
    %279 = vmatpush.msra.mxu0 0.0
    %280 = vmatpush.msra.mxu0 0.0
    %281 = vmatpush.msra.mxu0 0.0
    %282 = vmatpush.msra.mxu0 0.0
    %283 = vmatpush.msra.mxu0 0.0
    %284 = vmatpush.msra.mxu0 0.0
    %285 = vmatpush.msra.mxu0 0.0
    %286 = vmatpush.msra.mxu0 0.0
    %287 = vmatpush.msra.mxu0 0.0
    %288 = vmatpush.msra.mxu0 0.0
    %289 = vmatpush.msra.mxu0 0.0
    %290 = vmatpush.msra.mxu0 0.0
    %291 = vmatpush.msra.mxu0 0.0
    %292 = vmatpush.msra.mxu0 %v155
    %293 = vmatmul.f32.gmra.mxu0 %v159
    %v294 = vpop.f32.mrf.mxu0
    %v295 = vadd.f32 %v227, %v294
    %296 = vmatmul.f32.gmra.mxu0 %v162
    %v297 = vpop.f32.mrf.mxu0
    %v298 = vadd.f32 %v230, %v297
    %299 = vmatmul.f32.gmra.mxu0 %v165
    %v300 = vpop.f32.mrf.mxu0
    %v301 = vadd.f32 %v233, %v300
    %302 = vmatmul.f32.gmra.mxu0 %v168
    %v303 = vpop.f32.mrf.mxu0
    %v304 = vadd.f32 %v236, %v303
    %305 = vmatmul.f32.gmra.mxu0 %v171
    %v306 = vpop.f32.mrf.mxu0
    %v307 = vadd.f32 %v239, %v306
    %308 = vmatmul.f32.gmra.mxu0 %v174
    %v309 = vpop.f32.mrf.mxu0
    %v310 = vadd.f32 %v242, %v309
    %311 = vmatmul.f32.gmra.mxu0 %v177
    %v312 = vpop.f32.mrf.mxu0
    %v313 = vadd.f32 %v245, %v312
    %314 = vmatmul.f32.gmra.mxu0 %v180
    %v315 = vpop.f32.mrf.mxu0
    %v316 = vadd.f32 %v248, %v315
    %317 = vmatmul.f32.gmra.mxu0 %v183
    %v318 = vpop.f32.mrf.mxu0
    %v319 = vadd.f32 %v251, %v318
    %320 = vmatmul.f32.gmra.mxu0 %v186
    %v321 = vpop.f32.mrf.mxu0
    %v322 = vadd.f32 %v254, %v321
    %323 = vmatmul.f32.gmra.mxu0 %v189
    %v324 = vpop.f32.mrf.mxu0
    %v325 = vadd.f32 %v257, %v324
    %326 = vmatmul.f32.gmra.mxu0 %v192
    %v327 = vpop.f32.mrf.mxu0
    %v328 = vadd.f32 %v260, %v327
    %329 = vmatmul.f32.gmra.mxu0 %v195
    %v330 = vpop.f32.mrf.mxu0
    %v331 = vadd.f32 %v263, %v330
    %332 = vmatmul.f32.gmra.mxu0 %v198
    %v333 = vpop.f32.mrf.mxu0
    %v334 = vadd.f32 %v266, %v333
    %335 = vmatmul.f32.gmra.mxu0 %v201
    %v336 = vpop.f32.mrf.mxu0
    %v337 = vadd.f32 %v269, %v336
    %338 = vmatmul.f32.gmra.mxu0 %v204
    %v339 = vpop.f32.mrf.mxu0
    %v340 = vadd.f32 %v272, %v339
    %341 = vmatmul.f32.gmra.mxu0 %v207
    %v342 = vpop.f32.mrf.mxu0
    %v343 = vadd.f32 %v275, %v342
    %344 = vdwg.mxu0
    %345 = vmatpush.msra.mxu0 %v154
    %346 = vmatpush.msra.mxu0 %v152
    %347 = vmatpush.msra.mxu0 %v150
    %348 = vmatpush.msra.mxu0 %v148
    %349 = vmatpush.msra.mxu0 %v146
    %350 = vmatpush.msra.mxu0 %v144
    %351 = vmatpush.msra.mxu0 %v142
    %352 = vmatpush.msra.mxu0 %v140
    %353 = vmatpush.msra.mxu0 %v138
    %354 = vmatpush.msra.mxu0 %v136
    %355 = vmatpush.msra.mxu0 %v134
    %356 = vmatpush.msra.mxu0 %v132
    %357 = vmatpush.msra.mxu0 %v130
    %358 = vmatpush.msra.mxu0 %v128
    %359 = vmatpush.msra.mxu0 %v126
    %360 = vmatpush.msra.mxu0 %v124
    %361 = vmatmul.f32.gmra.mxu0 %v89
    %v362 = vpop.f32.mrf.mxu0
    %v363 = vadd.f32 0.0, %v362
    %364 = vmatmul.f32.gmra.mxu0 %v91
    %v365 = vpop.f32.mrf.mxu0
    %v366 = vadd.f32 0.0, %v365
    %367 = vmatmul.f32.gmra.mxu0 %v93
    %v368 = vpop.f32.mrf.mxu0
    %v369 = vadd.f32 0.0, %v368
    %370 = vmatmul.f32.gmra.mxu0 %v95
    %v371 = vpop.f32.mrf.mxu0
    %v372 = vadd.f32 0.0, %v371
    %373 = vmatmul.f32.gmra.mxu0 %v97
    %v374 = vpop.f32.mrf.mxu0
    %v375 = vadd.f32 0.0, %v374
    %376 = vmatmul.f32.gmra.mxu0 %v99
    %v377 = vpop.f32.mrf.mxu0
    %v378 = vadd.f32 0.0, %v377
    %379 = vmatmul.f32.gmra.mxu0 %v101
    %v380 = vpop.f32.mrf.mxu0
    %v381 = vadd.f32 0.0, %v380
    %382 = vmatmul.f32.gmra.mxu0 %v103
    %v383 = vpop.f32.mrf.mxu0
    %v384 = vadd.f32 0.0, %v383
    %385 = vmatmul.f32.gmra.mxu0 %v105
    %v386 = vpop.f32.mrf.mxu0
    %v387 = vadd.f32 0.0, %v386
    %388 = vmatmul.f32.gmra.mxu0 %v107
    %v389 = vpop.f32.mrf.mxu0
    %v390 = vadd.f32 0.0, %v389
    %391 = vmatmul.f32.gmra.mxu0 %v109
    %v392 = vpop.f32.mrf.mxu0
    %v393 = vadd.f32 0.0, %v392
    %394 = vmatmul.f32.gmra.mxu0 %v111
    %v395 = vpop.f32.mrf.mxu0
    %v396 = vadd.f32 0.0, %v395
    %397 = vmatmul.f32.gmra.mxu0 %v113
    %v398 = vpop.f32.mrf.mxu0
    %v399 = vadd.f32 0.0, %v398
    %400 = vmatmul.f32.gmra.mxu0 %v115
    %v401 = vpop.f32.mrf.mxu0
    %v402 = vadd.f32 0.0, %v401
    %403 = vmatmul.f32.gmra.mxu0 %v117
    %v404 = vpop.f32.mrf.mxu0
    %v405 = vadd.f32 0.0, %v404
    %406 = vmatmul.f32.gmra.mxu0 %v119
    %v407 = vpop.f32.mrf.mxu0
    %v408 = vadd.f32 0.0, %v407
    %409 = vmatmul.f32.gmra.mxu0 %v121
    %v410 = vpop.f32.mrf.mxu0
    %v411 = vadd.f32 0.0, %v410
    %412 = vdwg.mxu0
    %413 = vmatpush.msra.mxu0 0.0
    %414 = vmatpush.msra.mxu0 0.0
    %415 = vmatpush.msra.mxu0 0.0
    %416 = vmatpush.msra.mxu0 0.0
    %417 = vmatpush.msra.mxu0 0.0
    %418 = vmatpush.msra.mxu0 0.0
    %419 = vmatpush.msra.mxu0 0.0
    %420 = vmatpush.msra.mxu0 0.0
    %421 = vmatpush.msra.mxu0 0.0
    %422 = vmatpush.msra.mxu0 0.0
    %423 = vmatpush.msra.mxu0 0.0
    %424 = vmatpush.msra.mxu0 0.0
    %425 = vmatpush.msra.mxu0 0.0
    %426 = vmatpush.msra.mxu0 0.0
    %427 = vmatpush.msra.mxu0 0.0
    %428 = vmatpush.msra.mxu0 %v156
    %429 = vmatmul.f32.gmra.mxu0 %v159
    %v430 = vpop.f32.mrf.mxu0
    %v431 = vadd.f32 %v363, %v430
    %432 = vmatmul.f32.gmra.mxu0 %v162
    %v433 = vpop.f32.mrf.mxu0
    %v434 = vadd.f32 %v366, %v433
    %435 = vmatmul.f32.gmra.mxu0 %v165
    %v436 = vpop.f32.mrf.mxu0
    %v437 = vadd.f32 %v369, %v436
    %438 = vmatmul.f32.gmra.mxu0 %v168
    %v439 = vpop.f32.mrf.mxu0
    %v440 = vadd.f32 %v372, %v439
    %441 = vmatmul.f32.gmra.mxu0 %v171
    %v442 = vpop.f32.mrf.mxu0
    %v443 = vadd.f32 %v375, %v442
    %444 = vmatmul.f32.gmra.mxu0 %v174
    %v445 = vpop.f32.mrf.mxu0
    %v446 = vadd.f32 %v378, %v445
    %447 = vmatmul.f32.gmra.mxu0 %v177
    %v448 = vpop.f32.mrf.mxu0
    %v449 = vadd.f32 %v381, %v448
    %450 = vmatmul.f32.gmra.mxu0 %v180
    %v451 = vpop.f32.mrf.mxu0
    %v452 = vadd.f32 %v384, %v451
    %453 = vmatmul.f32.gmra.mxu0 %v183
    %v454 = vpop.f32.mrf.mxu0
    %v455 = vadd.f32 %v387, %v454
    %456 = vmatmul.f32.gmra.mxu0 %v186
    %v457 = vpop.f32.mrf.mxu0
    %v458 = vadd.f32 %v390, %v457
    %459 = vmatmul.f32.gmra.mxu0 %v189
    %v460 = vpop.f32.mrf.mxu0
    %v461 = vadd.f32 %v393, %v460
    %462 = vmatmul.f32.gmra.mxu0 %v192
    %v463 = vpop.f32.mrf.mxu0
    %v464 = vadd.f32 %v396, %v463
    %465 = vmatmul.f32.gmra.mxu0 %v195
    %v466 = vpop.f32.mrf.mxu0
    %v467 = vadd.f32 %v399, %v466
    %468 = vmatmul.f32.gmra.mxu0 %v198
    %v469 = vpop.f32.mrf.mxu0
    %v470 = vadd.f32 %v402, %v469
    %471 = vmatmul.f32.gmra.mxu0 %v201
    %v472 = vpop.f32.mrf.mxu0
    %v473 = vadd.f32 %v405, %v472
    %474 = vmatmul.f32.gmra.mxu0 %v204
    %v475 = vpop.f32.mrf.mxu0
    %v476 = vadd.f32 %v408, %v475
    %477 = vmatmul.f32.gmra.mxu0 %v207
    %v478 = vpop.f32.mrf.mxu0
    %v479 = vadd.f32 %v411, %v478
    %480 = vdwg.mxu0
    %v482 = vsel %vm157, %v22, 0
    %v485 = vsel %vm157, %v24, 0
    %v488 = vsel %vm157, %v26, 0
    %v491 = vsel %vm157, %v28, 0
    %v494 = vsel %vm157, %v30, 0
    %v497 = vsel %vm157, %v32, 0
    %v500 = vsel %vm157, %v34, 0
    %v503 = vsel %vm157, %v36, 0
    %v506 = vsel %vm157, %v38, 0
    %v509 = vsel %vm157, %v40, 0
    %v512 = vsel %vm157, %v42, 0
    %v515 = vsel %vm157, %v44, 0
    %v518 = vsel %vm157, %v46, 0
    %v521 = vsel %vm157, %v48, 0
    %v524 = vsel %vm157, %v50, 0
    %v527 = vsel %vm157, %v52, 0
    %v530 = vsel %vm157, %v54, 0
    %532 = vmatpush.msra.mxu0 %v85
    %533 = vmatpush.msra.mxu0 %v83
    %534 = vmatpush.msra.mxu0 %v81
    %535 = vmatpush.msra.mxu0 %v79
    %536 = vmatpush.msra.mxu0 %v77
    %537 = vmatpush.msra.mxu0 %v75
    %538 = vmatpush.msra.mxu0 %v73
    %539 = vmatpush.msra.mxu0 %v71
    %540 = vmatpush.msra.mxu0 %v69
    %541 = vmatpush.msra.mxu0 %v67
    %542 = vmatpush.msra.mxu0 %v65
    %543 = vmatpush.msra.mxu0 %v63
    %544 = vmatpush.msra.mxu0 %v61
    %545 = vmatpush.msra.mxu0 %v59
    %546 = vmatpush.msra.mxu0 %v57
    %547 = vmatpush.msra.mxu0 %v55
    %548 = vmatmul.f32.gmra.mxu0 %v21
    %v549 = vpop.f32.mrf.mxu0
    %v550 = vadd.f32 %v295, %v549
    %551 = vmatmul.f32.gmra.mxu0 %v23
    %v552 = vpop.f32.mrf.mxu0
    %v553 = vadd.f32 %v298, %v552
    %554 = vmatmul.f32.gmra.mxu0 %v25
    %v555 = vpop.f32.mrf.mxu0
    %v556 = vadd.f32 %v301, %v555
    %557 = vmatmul.f32.gmra.mxu0 %v27
    %v558 = vpop.f32.mrf.mxu0
    %v559 = vadd.f32 %v304, %v558
    %560 = vmatmul.f32.gmra.mxu0 %v29
    %v561 = vpop.f32.mrf.mxu0
    %v562 = vadd.f32 %v307, %v561
    %563 = vmatmul.f32.gmra.mxu0 %v31
    %v564 = vpop.f32.mrf.mxu0
    %v565 = vadd.f32 %v310, %v564
    %566 = vmatmul.f32.gmra.mxu0 %v33
    %v567 = vpop.f32.mrf.mxu0
    %v568 = vadd.f32 %v313, %v567
    %569 = vmatmul.f32.gmra.mxu0 %v35
    %v570 = vpop.f32.mrf.mxu0
    %v571 = vadd.f32 %v316, %v570
    %572 = vmatmul.f32.gmra.mxu0 %v37
    %v573 = vpop.f32.mrf.mxu0
    %v574 = vadd.f32 %v319, %v573
    %575 = vmatmul.f32.gmra.mxu0 %v39
    %v576 = vpop.f32.mrf.mxu0
    %v577 = vadd.f32 %v322, %v576
    %578 = vmatmul.f32.gmra.mxu0 %v41
    %v579 = vpop.f32.mrf.mxu0
    %v580 = vadd.f32 %v325, %v579
    %581 = vmatmul.f32.gmra.mxu0 %v43
    %v582 = vpop.f32.mrf.mxu0
    %v583 = vadd.f32 %v328, %v582
    %584 = vmatmul.f32.gmra.mxu0 %v45
    %v585 = vpop.f32.mrf.mxu0
    %v586 = vadd.f32 %v331, %v585
    %587 = vmatmul.f32.gmra.mxu0 %v47
    %v588 = vpop.f32.mrf.mxu0
    %v589 = vadd.f32 %v334, %v588
    %590 = vmatmul.f32.gmra.mxu0 %v49
    %v591 = vpop.f32.mrf.mxu0
    %v592 = vadd.f32 %v337, %v591
    %593 = vmatmul.f32.gmra.mxu0 %v51
    %v594 = vpop.f32.mrf.mxu0
    %v595 = vadd.f32 %v340, %v594
    %596 = vmatmul.f32.gmra.mxu0 %v53
    %v597 = vpop.f32.mrf.mxu0
    %v598 = vadd.f32 %v343, %v597
    %599 = vdwg.mxu0
    %600 = vmatpush.msra.mxu0 0.0
    %601 = vmatpush.msra.mxu0 0.0
    %602 = vmatpush.msra.mxu0 0.0
    %603 = vmatpush.msra.mxu0 0.0
    %604 = vmatpush.msra.mxu0 0.0
    %605 = vmatpush.msra.mxu0 0.0
    %606 = vmatpush.msra.mxu0 0.0
    %607 = vmatpush.msra.mxu0 0.0
    %608 = vmatpush.msra.mxu0 0.0
    %609 = vmatpush.msra.mxu0 0.0
    %610 = vmatpush.msra.mxu0 0.0
    %611 = vmatpush.msra.mxu0 0.0
    %612 = vmatpush.msra.mxu0 0.0
    %613 = vmatpush.msra.mxu0 0.0
    %614 = vmatpush.msra.mxu0 0.0
    %615 = vmatpush.msra.mxu0 %v87
    %616 = vmatmul.f32.gmra.mxu0 %v482
    %v617 = vpop.f32.mrf.mxu0
    %v618 = vadd.f32 %v550, %v617
    %619 = vmatmul.f32.gmra.mxu0 %v485
    %v620 = vpop.f32.mrf.mxu0
    %v621 = vadd.f32 %v553, %v620
    %622 = vmatmul.f32.gmra.mxu0 %v488
    %v623 = vpop.f32.mrf.mxu0
    %v624 = vadd.f32 %v556, %v623
    %625 = vmatmul.f32.gmra.mxu0 %v491
    %v626 = vpop.f32.mrf.mxu0
    %v627 = vadd.f32 %v559, %v626
    %628 = vmatmul.f32.gmra.mxu0 %v494
    %v629 = vpop.f32.mrf.mxu0
    %v630 = vadd.f32 %v562, %v629
    %631 = vmatmul.f32.gmra.mxu0 %v497
    %v632 = vpop.f32.mrf.mxu0
    %v633 = vadd.f32 %v565, %v632
    %634 = vmatmul.f32.gmra.mxu0 %v500
    %v635 = vpop.f32.mrf.mxu0
    %v636 = vadd.f32 %v568, %v635
    %637 = vmatmul.f32.gmra.mxu0 %v503
    %v638 = vpop.f32.mrf.mxu0
    %v639 = vadd.f32 %v571, %v638
    %640 = vmatmul.f32.gmra.mxu0 %v506
    %v641 = vpop.f32.mrf.mxu0
    %v642 = vadd.f32 %v574, %v641
    %643 = vmatmul.f32.gmra.mxu0 %v509
    %v644 = vpop.f32.mrf.mxu0
    %v645 = vadd.f32 %v577, %v644
    %646 = vmatmul.f32.gmra.mxu0 %v512
    %v647 = vpop.f32.mrf.mxu0
    %v648 = vadd.f32 %v580, %v647
    %649 = vmatmul.f32.gmra.mxu0 %v515
    %v650 = vpop.f32.mrf.mxu0
    %v651 = vadd.f32 %v583, %v650
    %652 = vmatmul.f32.gmra.mxu0 %v518
    %v653 = vpop.f32.mrf.mxu0
    %v654 = vadd.f32 %v586, %v653
    %655 = vmatmul.f32.gmra.mxu0 %v521
    %v656 = vpop.f32.mrf.mxu0
    %v657 = vadd.f32 %v589, %v656
    %658 = vmatmul.f32.gmra.mxu0 %v524
    %v659 = vpop.f32.mrf.mxu0
    %v660 = vadd.f32 %v592, %v659
    %661 = vmatmul.f32.gmra.mxu0 %v527
    %v662 = vpop.f32.mrf.mxu0
    %v663 = vadd.f32 %v595, %v662
    %664 = vmatmul.f32.gmra.mxu0 %v530
    %v665 = vpop.f32.mrf.mxu0
    %v666 = vadd.f32 %v598, %v665
    %667 = vdwg.mxu0
    %668 = vmatpush.msra.mxu0 %v86
    %669 = vmatpush.msra.mxu0 %v84
    %670 = vmatpush.msra.mxu0 %v82
    %671 = vmatpush.msra.mxu0 %v80
    %672 = vmatpush.msra.mxu0 %v78
    %673 = vmatpush.msra.mxu0 %v76
    %674 = vmatpush.msra.mxu0 %v74
    %675 = vmatpush.msra.mxu0 %v72
    %676 = vmatpush.msra.mxu0 %v70
    %677 = vmatpush.msra.mxu0 %v68
    %678 = vmatpush.msra.mxu0 %v66
    %679 = vmatpush.msra.mxu0 %v64
    %680 = vmatpush.msra.mxu0 %v62
    %681 = vmatpush.msra.mxu0 %v60
    %682 = vmatpush.msra.mxu0 %v58
    %683 = vmatpush.msra.mxu0 %v56
    %684 = vmatmul.f32.gmra.mxu0 %v21
    %v685 = vpop.f32.mrf.mxu0
    %v686 = vadd.f32 %v431, %v685
    %687 = vmatmul.f32.gmra.mxu0 %v23
    %v688 = vpop.f32.mrf.mxu0
    %v689 = vadd.f32 %v434, %v688
    %690 = vmatmul.f32.gmra.mxu0 %v25
    %v691 = vpop.f32.mrf.mxu0
    %v692 = vadd.f32 %v437, %v691
    %693 = vmatmul.f32.gmra.mxu0 %v27
    %v694 = vpop.f32.mrf.mxu0
    %v695 = vadd.f32 %v440, %v694
    %696 = vmatmul.f32.gmra.mxu0 %v29
    %v697 = vpop.f32.mrf.mxu0
    %v698 = vadd.f32 %v443, %v697
    %699 = vmatmul.f32.gmra.mxu0 %v31
    %v700 = vpop.f32.mrf.mxu0
    %v701 = vadd.f32 %v446, %v700
    %702 = vmatmul.f32.gmra.mxu0 %v33
    %v703 = vpop.f32.mrf.mxu0
    %v704 = vadd.f32 %v449, %v703
    %705 = vmatmul.f32.gmra.mxu0 %v35
    %v706 = vpop.f32.mrf.mxu0
    %v707 = vadd.f32 %v452, %v706
    %708 = vmatmul.f32.gmra.mxu0 %v37
    %v709 = vpop.f32.mrf.mxu0
    %v710 = vadd.f32 %v455, %v709
    %711 = vmatmul.f32.gmra.mxu0 %v39
    %v712 = vpop.f32.mrf.mxu0
    %v713 = vadd.f32 %v458, %v712
    %714 = vmatmul.f32.gmra.mxu0 %v41
    %v715 = vpop.f32.mrf.mxu0
    %v716 = vadd.f32 %v461, %v715
    %717 = vmatmul.f32.gmra.mxu0 %v43
    %v718 = vpop.f32.mrf.mxu0
    %v719 = vadd.f32 %v464, %v718
    %720 = vmatmul.f32.gmra.mxu0 %v45
    %v721 = vpop.f32.mrf.mxu0
    %v722 = vadd.f32 %v467, %v721
    %723 = vmatmul.f32.gmra.mxu0 %v47
    %v724 = vpop.f32.mrf.mxu0
    %v725 = vadd.f32 %v470, %v724
    %726 = vmatmul.f32.gmra.mxu0 %v49
    %v727 = vpop.f32.mrf.mxu0
    %v728 = vadd.f32 %v473, %v727
    %729 = vmatmul.f32.gmra.mxu0 %v51
    %v730 = vpop.f32.mrf.mxu0
    %v731 = vadd.f32 %v476, %v730
    %732 = vmatmul.f32.gmra.mxu0 %v53
    %v733 = vpop.f32.mrf.mxu0
    %v734 = vadd.f32 %v479, %v733
    %735 = vdwg.mxu0
    %736 = vmatpush.msra.mxu0 0.0
    %737 = vmatpush.msra.mxu0 0.0
    %738 = vmatpush.msra.mxu0 0.0
    %739 = vmatpush.msra.mxu0 0.0
    %740 = vmatpush.msra.mxu0 0.0
    %741 = vmatpush.msra.mxu0 0.0
    %742 = vmatpush.msra.mxu0 0.0
    %743 = vmatpush.msra.mxu0 0.0
    %744 = vmatpush.msra.mxu0 0.0
    %745 = vmatpush.msra.mxu0 0.0
    %746 = vmatpush.msra.mxu0 0.0
    %747 = vmatpush.msra.mxu0 0.0
    %748 = vmatpush.msra.mxu0 0.0
    %749 = vmatpush.msra.mxu0 0.0
    %750 = vmatpush.msra.mxu0 0.0
    %751 = vmatpush.msra.mxu0 %v88
    %752 = vmatmul.f32.gmra.mxu0 %v482
    %v753 = vpop.f32.mrf.mxu0
    %v754 = vadd.f32 %v686, %v753
    %755 = vmatmul.f32.gmra.mxu0 %v485
    %v756 = vpop.f32.mrf.mxu0
    %v757 = vadd.f32 %v689, %v756
    %758 = vmatmul.f32.gmra.mxu0 %v488
    %v759 = vpop.f32.mrf.mxu0
    %v760 = vadd.f32 %v692, %v759
    %761 = vmatmul.f32.gmra.mxu0 %v491
    %v762 = vpop.f32.mrf.mxu0
    %v763 = vadd.f32 %v695, %v762
    %764 = vmatmul.f32.gmra.mxu0 %v494
    %v765 = vpop.f32.mrf.mxu0
    %v766 = vadd.f32 %v698, %v765
    %767 = vmatmul.f32.gmra.mxu0 %v497
    %v768 = vpop.f32.mrf.mxu0
    %v769 = vadd.f32 %v701, %v768
    %770 = vmatmul.f32.gmra.mxu0 %v500
    %v771 = vpop.f32.mrf.mxu0
    %v772 = vadd.f32 %v704, %v771
    %773 = vmatmul.f32.gmra.mxu0 %v503
    %v774 = vpop.f32.mrf.mxu0
    %v775 = vadd.f32 %v707, %v774
    %776 = vmatmul.f32.gmra.mxu0 %v506
    %v777 = vpop.f32.mrf.mxu0
    %v778 = vadd.f32 %v710, %v777
    %779 = vmatmul.f32.gmra.mxu0 %v509
    %v780 = vpop.f32.mrf.mxu0
    %v781 = vadd.f32 %v713, %v780
    %782 = vmatmul.f32.gmra.mxu0 %v512
    %v783 = vpop.f32.mrf.mxu0
    %v784 = vadd.f32 %v716, %v783
    %785 = vmatmul.f32.gmra.mxu0 %v515
    %v786 = vpop.f32.mrf.mxu0
    %v787 = vadd.f32 %v719, %v786
    %788 = vmatmul.f32.gmra.mxu0 %v518
    %v789 = vpop.f32.mrf.mxu0
    %v790 = vadd.f32 %v722, %v789
    %791 = vmatmul.f32.gmra.mxu0 %v521
    %v792 = vpop.f32.mrf.mxu0
    %v793 = vadd.f32 %v725, %v792
    %794 = vmatmul.f32.gmra.mxu0 %v524
    %v795 = vpop.f32.mrf.mxu0
    %v796 = vadd.f32 %v728, %v795
    %797 = vmatmul.f32.gmra.mxu0 %v527
    %v798 = vpop.f32.mrf.mxu0
    %v799 = vadd.f32 %v731, %v798
    %800 = vmatmul.f32.gmra.mxu0 %v530
    %v801 = vpop.f32.mrf.mxu0
    %v802 = vadd.f32 %v734, %v801
    %803 = vdwg.mxu0
    %v804 = vld [vmem:[%s4] sm:$0xff]
    %v805 = vld [vmem:[%s4 + $0x8] sm:$0xff]
    %v806 = vld [vmem:[%s4 + $0x10] sm:$0xff]
    %v807 = vld [vmem:[%s4 + $0x18] sm:$0xff]
    %v808 = vld [vmem:[%s4 + $0x20] sm:$0xff]
    %v809 = vld [vmem:[%s4 + $0x28] sm:$0xff]
    %v810 = vld [vmem:[%s4 + $0x30] sm:$0xff]
    %v811 = vld [vmem:[%s4 + $0x38] sm:$0xff]
    %v812 = vld [vmem:[%s4 + $0x40] sm:$0xff]
    %v813 = vld [vmem:[%s4 + $0x48] sm:$0xff]
    %v814 = vld [vmem:[%s4 + $0x50] sm:$0xff]
    %v815 = vld [vmem:[%s4 + $0x58] sm:$0xff]
    %v816 = vld [vmem:[%s4 + $0x60] sm:$0xff]
    %v817 = vld [vmem:[%s4 + $0x68] sm:$0xff]
    %v818 = vld [vmem:[%s4 + $0x70] sm:$0xff]
    %v819 = vld [vmem:[%s4 + $0x78] sm:$0xff]
    %v820 = vld [vmem:[%s4 + $0x80] sm:$0xff]
    %v821 = vld [vmem:[%s4 + $0x88] sm:$0xff]
    %v822 = vld [vmem:[%s4 + $0x90] sm:$0xff]
    %v823 = vld [vmem:[%s4 + $0x98] sm:$0xff]
    %v824 = vld [vmem:[%s4 + $0xa0] sm:$0xff]
    %v825 = vld [vmem:[%s4 + $0xa8] sm:$0xff]
    %v826 = vld [vmem:[%s4 + $0xb0] sm:$0xff]
    %v827 = vld [vmem:[%s4 + $0xb8] sm:$0xff]
    %v828 = vld [vmem:[%s4 + $0xc0] sm:$0xff]
    %v829 = vld [vmem:[%s4 + $0xc8] sm:$0xff]
    %v830 = vld [vmem:[%s4 + $0xd0] sm:$0xff]
    %v831 = vld [vmem:[%s4 + $0xd8] sm:$0xff]
    %v832 = vld [vmem:[%s4 + $0xe0] sm:$0xff]
    %v833 = vld [vmem:[%s4 + $0xe8] sm:$0xff]
    %v834 = vld [vmem:[%s4 + $0xf0] sm:$0xff]
    %v835 = vld [vmem:[%s4 + $0xf8] sm:$0xff]
    %v836 = vld [vmem:[%s4 + $0x100] sm:$0xff]
    %v837 = vld [vmem:[%s4 + $0x108] sm:$0xff]
    %v838 = vadd.f32 %v618, %v804
    %v839 = vadd.f32 %v754, %v805
    %v840 = vadd.f32 %v621, %v806
    %v841 = vadd.f32 %v757, %v807
    %v842 = vadd.f32 %v624, %v808
    %v843 = vadd.f32 %v760, %v809
    %v844 = vadd.f32 %v627, %v810
    %v845 = vadd.f32 %v763, %v811
    %v846 = vadd.f32 %v630, %v812
    %v847 = vadd.f32 %v766, %v813
    %v848 = vadd.f32 %v633, %v814
    %v849 = vadd.f32 %v769, %v815
    %v850 = vadd.f32 %v636, %v816
    %v851 = vadd.f32 %v772, %v817
    %v852 = vadd.f32 %v639, %v818
    %v853 = vadd.f32 %v775, %v819
    %v854 = vadd.f32 %v642, %v820
    %v855 = vadd.f32 %v778, %v821
    %v856 = vadd.f32 %v645, %v822
    %v857 = vadd.f32 %v781, %v823
    %v858 = vadd.f32 %v648, %v824
    %v859 = vadd.f32 %v784, %v825
    %v860 = vadd.f32 %v651, %v826
    %v861 = vadd.f32 %v787, %v827
    %v862 = vadd.f32 %v654, %v828
    %v863 = vadd.f32 %v790, %v829
    %v864 = vadd.f32 %v657, %v830
    %v865 = vadd.f32 %v793, %v831
    %v866 = vadd.f32 %v660, %v832
    %v867 = vadd.f32 %v796, %v833
    %v868 = vadd.f32 %v663, %v834
    %v869 = vadd.f32 %v799, %v835
    %v870 = vadd.f32 %v666, %v836
    %v871 = vadd.f32 %v802, %v837
    %v872 = vxor.u32 %v838, 2147483648
    %v873 = vxor.u32 %v839, 2147483648
    %v874 = vxor.u32 %v840, 2147483648
    %v875 = vxor.u32 %v841, 2147483648
    %v876 = vxor.u32 %v842, 2147483648
    %v877 = vxor.u32 %v843, 2147483648
    %v878 = vxor.u32 %v844, 2147483648
    %v879 = vxor.u32 %v845, 2147483648
    %v880 = vxor.u32 %v846, 2147483648
    %v881 = vxor.u32 %v847, 2147483648
    %v882 = vxor.u32 %v848, 2147483648
    %v883 = vxor.u32 %v849, 2147483648
    %v884 = vxor.u32 %v850, 2147483648
    %v885 = vxor.u32 %v851, 2147483648
    %v886 = vxor.u32 %v852, 2147483648
    %v887 = vxor.u32 %v853, 2147483648
    %v888 = vxor.u32 %v854, 2147483648
    %v889 = vxor.u32 %v855, 2147483648
    %v890 = vxor.u32 %v856, 2147483648
    %v891 = vxor.u32 %v857, 2147483648
    %v892 = vxor.u32 %v858, 2147483648
    %v893 = vxor.u32 %v859, 2147483648
    %v894 = vxor.u32 %v860, 2147483648
    %v895 = vxor.u32 %v861, 2147483648
    %v896 = vxor.u32 %v862, 2147483648
    %v897 = vxor.u32 %v863, 2147483648
    %v898 = vxor.u32 %v864, 2147483648
    %v899 = vxor.u32 %v865, 2147483648
    %v900 = vxor.u32 %v866, 2147483648
    %v901 = vxor.u32 %v867, 2147483648
    %v902 = vxor.u32 %v868, 2147483648
    %v903 = vxor.u32 %v869, 2147483648
    %v904 = vxor.u32 %v870, 2147483648
    %v905 = vxor.u32 %v871, 2147483648
    %v906 = vmul.f32 %v872, 1.442695
    %v907 = vpow.pop %v906
    %v908 = vmul.f32 %v873, 1.442695
    %v909 = vpow.pop %v908
    %v910 = vmul.f32 %v874, 1.442695
    %v911 = vpow.pop %v910
    %v912 = vmul.f32 %v875, 1.442695
    %v913 = vpow.pop %v912
    %v914 = vmul.f32 %v876, 1.442695
    %v915 = vpow.pop %v914
    %v916 = vmul.f32 %v877, 1.442695
    %v917 = vpow.pop %v916
    %v918 = vmul.f32 %v878, 1.442695
    %v919 = vpow.pop %v918
    %v920 = vmul.f32 %v879, 1.442695
    %v921 = vpow.pop %v920
    %v922 = vmul.f32 %v880, 1.442695
    %v923 = vpow.pop %v922
    %v924 = vmul.f32 %v881, 1.442695
    %v925 = vpow.pop %v924
    %v926 = vmul.f32 %v882, 1.442695
    %v927 = vpow.pop %v926
    %v928 = vmul.f32 %v883, 1.442695
    %v929 = vpow.pop %v928
    %v930 = vmul.f32 %v884, 1.442695
    %v931 = vpow.pop %v930
    %v932 = vmul.f32 %v885, 1.442695
    %v933 = vpow.pop %v932
    %v934 = vmul.f32 %v886, 1.442695
    %v935 = vpow.pop %v934
    %v936 = vmul.f32 %v887, 1.442695
    %v937 = vpow.pop %v936
    %v938 = vmul.f32 %v888, 1.442695
    %v939 = vpow.pop %v938
    %v940 = vmul.f32 %v889, 1.442695
    %v941 = vpow.pop %v940
    %v942 = vmul.f32 %v890, 1.442695
    %v943 = vpow.pop %v942
    %v944 = vmul.f32 %v891, 1.442695
    %v945 = vpow.pop %v944
    %v946 = vmul.f32 %v892, 1.442695
    %v947 = vpow.pop %v946
    %v948 = vmul.f32 %v893, 1.442695
    %v949 = vpow.pop %v948
    %v950 = vmul.f32 %v894, 1.442695
    %v951 = vpow.pop %v950
    %v952 = vmul.f32 %v895, 1.442695
    %v953 = vpow.pop %v952
    %v954 = vmul.f32 %v896, 1.442695
    %v955 = vpow.pop %v954
    %v956 = vmul.f32 %v897, 1.442695
    %v957 = vpow.pop %v956
    %v958 = vmul.f32 %v898, 1.442695
    %v959 = vpow.pop %v958
    %v960 = vmul.f32 %v899, 1.442695
    %v961 = vpow.pop %v960
    %v962 = vmul.f32 %v900, 1.442695
    %v963 = vpow.pop %v962
    %v964 = vmul.f32 %v901, 1.442695
    %v965 = vpow.pop %v964
    %v966 = vmul.f32 %v902, 1.442695
    %v967 = vpow.pop %v966
    %v968 = vmul.f32 %v903, 1.442695
    %v969 = vpow.pop %v968
    %v970 = vmul.f32 %v904, 1.442695
    %v971 = vpow.pop %v970
    %v972 = vmul.f32 %v905, 1.442695
    %v973 = vpow.pop %v972
    %v974 = vadd.f32 %v907, 1.0
    %v975 = vadd.f32 %v909, 1.0
    %v976 = vadd.f32 %v911, 1.0
    %v977 = vadd.f32 %v913, 1.0
    %v978 = vadd.f32 %v915, 1.0
    %v979 = vadd.f32 %v917, 1.0
    %v980 = vadd.f32 %v919, 1.0
    %v981 = vadd.f32 %v921, 1.0
    %v982 = vadd.f32 %v923, 1.0
    %v983 = vadd.f32 %v925, 1.0
    %v984 = vadd.f32 %v927, 1.0
    %v985 = vadd.f32 %v929, 1.0
    %v986 = vadd.f32 %v931, 1.0
    %v987 = vadd.f32 %v933, 1.0
    %v988 = vadd.f32 %v935, 1.0
    %v989 = vadd.f32 %v937, 1.0
    %v990 = vadd.f32 %v939, 1.0
    %v991 = vadd.f32 %v941, 1.0
    %v992 = vadd.f32 %v943, 1.0
    %v993 = vadd.f32 %v945, 1.0
    %v994 = vadd.f32 %v947, 1.0
    %v995 = vadd.f32 %v949, 1.0
    %v996 = vadd.f32 %v951, 1.0
    %v997 = vadd.f32 %v953, 1.0
    %v998 = vadd.f32 %v955, 1.0
    %v999 = vadd.f32 %v957, 1.0
    %v1000 = vadd.f32 %v959, 1.0
    %v1001 = vadd.f32 %v961, 1.0
    %v1002 = vadd.f32 %v963, 1.0
    %v1003 = vadd.f32 %v965, 1.0
    %v1004 = vadd.f32 %v967, 1.0
    %v1005 = vadd.f32 %v969, 1.0
    %v1006 = vadd.f32 %v971, 1.0
    %v1007 = vadd.f32 %v973, 1.0
    %v1008 = vrcp.pop %v974
    %v1009 = vmul.f32 %v974, %v1008
    %v1010 = vsub.f32 1.0, %v1009
    %v1011 = vmul.f32 %v1008, %v1010
    %v1012 = vadd.f32 %v1008, %v1011
    %vm1013 = vweird.f32 %v974
    %vm1014 = vweird.f32 %v1008
    %vm1015 = vmor %vm1013, %vm1014
    %v1016 = vsel %vm1015, %v1008, %v1012
    %v1017 = vand.u32 2147483647, %v974
    %vm1018 = vcmp.eq.f32.partialorder %v1017, 8.507059e+37
    %v1019 = vand.u32 %v974, 2147483648
    %v1020 = vor.u32 1.1754944e-38, %v1019
    %v1021 = vsel %vm1018, %v1020, %v1016
    %v1022 = vmul.f32 1.0, %v1021
    %v1023 = vrcp.pop %v975
    %v1024 = vmul.f32 %v975, %v1023
    %v1025 = vsub.f32 1.0, %v1024
    %v1026 = vmul.f32 %v1023, %v1025
    %v1027 = vadd.f32 %v1023, %v1026
    %vm1028 = vweird.f32 %v975
    %vm1029 = vweird.f32 %v1023
    %vm1030 = vmor %vm1028, %vm1029
    %v1031 = vsel %vm1030, %v1023, %v1027
    %v1032 = vand.u32 2147483647, %v975
    %vm1033 = vcmp.eq.f32.partialorder %v1032, 8.507059e+37
    %v1034 = vand.u32 %v975, 2147483648
    %v1035 = vor.u32 1.1754944e-38, %v1034
    %v1036 = vsel %vm1033, %v1035, %v1031
    %v1037 = vmul.f32 1.0, %v1036
    %v1038 = vrcp.pop %v976
    %v1039 = vmul.f32 %v976, %v1038
    %v1040 = vsub.f32 1.0, %v1039
    %v1041 = vmul.f32 %v1038, %v1040
    %v1042 = vadd.f32 %v1038, %v1041
    %vm1043 = vweird.f32 %v976
    %vm1044 = vweird.f32 %v1038
    %vm1045 = vmor %vm1043, %vm1044
    %v1046 = vsel %vm1045, %v1038, %v1042
    %v1047 = vand.u32 2147483647, %v976
    %vm1048 = vcmp.eq.f32.partialorder %v1047, 8.507059e+37
    %v1049 = vand.u32 %v976, 2147483648
    %v1050 = vor.u32 1.1754944e-38, %v1049
    %v1051 = vsel %vm1048, %v1050, %v1046
    %v1052 = vmul.f32 1.0, %v1051
    %v1053 = vrcp.pop %v977
    %v1054 = vmul.f32 %v977, %v1053
    %v1055 = vsub.f32 1.0, %v1054
    %v1056 = vmul.f32 %v1053, %v1055
    %v1057 = vadd.f32 %v1053, %v1056
    %vm1058 = vweird.f32 %v977
    %vm1059 = vweird.f32 %v1053
    %vm1060 = vmor %vm1058, %vm1059
    %v1061 = vsel %vm1060, %v1053, %v1057
    %v1062 = vand.u32 2147483647, %v977
    %vm1063 = vcmp.eq.f32.partialorder %v1062, 8.507059e+37
    %v1064 = vand.u32 %v977, 2147483648
    %v1065 = vor.u32 1.1754944e-38, %v1064
    %v1066 = vsel %vm1063, %v1065, %v1061
    %v1067 = vmul.f32 1.0, %v1066
    %v1068 = vrcp.pop %v978
    %v1069 = vmul.f32 %v978, %v1068
    %v1070 = vsub.f32 1.0, %v1069
    %v1071 = vmul.f32 %v1068, %v1070
    %v1072 = vadd.f32 %v1068, %v1071
    %vm1073 = vweird.f32 %v978
    %vm1074 = vweird.f32 %v1068
    %vm1075 = vmor %vm1073, %vm1074
    %v1076 = vsel %vm1075, %v1068, %v1072
    %v1077 = vand.u32 2147483647, %v978
    %vm1078 = vcmp.eq.f32.partialorder %v1077, 8.507059e+37
    %v1079 = vand.u32 %v978, 2147483648
    %v1080 = vor.u32 1.1754944e-38, %v1079
    %v1081 = vsel %vm1078, %v1080, %v1076
    %v1082 = vmul.f32 1.0, %v1081
    %v1083 = vrcp.pop %v979
    %v1084 = vmul.f32 %v979, %v1083
    %v1085 = vsub.f32 1.0, %v1084
    %v1086 = vmul.f32 %v1083, %v1085
    %v1087 = vadd.f32 %v1083, %v1086
    %vm1088 = vweird.f32 %v979
    %vm1089 = vweird.f32 %v1083
    %vm1090 = vmor %vm1088, %vm1089
    %v1091 = vsel %vm1090, %v1083, %v1087
    %v1092 = vand.u32 2147483647, %v979
    %vm1093 = vcmp.eq.f32.partialorder %v1092, 8.507059e+37
    %v1094 = vand.u32 %v979, 2147483648
    %v1095 = vor.u32 1.1754944e-38, %v1094
    %v1096 = vsel %vm1093, %v1095, %v1091
    %v1097 = vmul.f32 1.0, %v1096
    %v1098 = vrcp.pop %v980
    %v1099 = vmul.f32 %v980, %v1098
    %v1100 = vsub.f32 1.0, %v1099
    %v1101 = vmul.f32 %v1098, %v1100
    %v1102 = vadd.f32 %v1098, %v1101
    %vm1103 = vweird.f32 %v980
    %vm1104 = vweird.f32 %v1098
    %vm1105 = vmor %vm1103, %vm1104
    %v1106 = vsel %vm1105, %v1098, %v1102
    %v1107 = vand.u32 2147483647, %v980
    %vm1108 = vcmp.eq.f32.partialorder %v1107, 8.507059e+37
    %v1109 = vand.u32 %v980, 2147483648
    %v1110 = vor.u32 1.1754944e-38, %v1109
    %v1111 = vsel %vm1108, %v1110, %v1106
    %v1112 = vmul.f32 1.0, %v1111
    %v1113 = vrcp.pop %v981
    %v1114 = vmul.f32 %v981, %v1113
    %v1115 = vsub.f32 1.0, %v1114
    %v1116 = vmul.f32 %v1113, %v1115
    %v1117 = vadd.f32 %v1113, %v1116
    %vm1118 = vweird.f32 %v981
    %vm1119 = vweird.f32 %v1113
    %vm1120 = vmor %vm1118, %vm1119
    %v1121 = vsel %vm1120, %v1113, %v1117
    %v1122 = vand.u32 2147483647, %v981
    %vm1123 = vcmp.eq.f32.partialorder %v1122, 8.507059e+37
    %v1124 = vand.u32 %v981, 2147483648
    %v1125 = vor.u32 1.1754944e-38, %v1124
    %v1126 = vsel %vm1123, %v1125, %v1121
    %v1127 = vmul.f32 1.0, %v1126
    %v1128 = vrcp.pop %v982
    %v1129 = vmul.f32 %v982, %v1128
    %v1130 = vsub.f32 1.0, %v1129
    %v1131 = vmul.f32 %v1128, %v1130
    %v1132 = vadd.f32 %v1128, %v1131
    %vm1133 = vweird.f32 %v982
    %vm1134 = vweird.f32 %v1128
    %vm1135 = vmor %vm1133, %vm1134
    %v1136 = vsel %vm1135, %v1128, %v1132
    %v1137 = vand.u32 2147483647, %v982
    %vm1138 = vcmp.eq.f32.partialorder %v1137, 8.507059e+37
    %v1139 = vand.u32 %v982, 2147483648
    %v1140 = vor.u32 1.1754944e-38, %v1139
    %v1141 = vsel %vm1138, %v1140, %v1136
    %v1142 = vmul.f32 1.0, %v1141
    %v1143 = vrcp.pop %v983
    %v1144 = vmul.f32 %v983, %v1143
    %v1145 = vsub.f32 1.0, %v1144
    %v1146 = vmul.f32 %v1143, %v1145
    %v1147 = vadd.f32 %v1143, %v1146
    %vm1148 = vweird.f32 %v983
    %vm1149 = vweird.f32 %v1143
    %vm1150 = vmor %vm1148, %vm1149
    %v1151 = vsel %vm1150, %v1143, %v1147
    %v1152 = vand.u32 2147483647, %v983
    %vm1153 = vcmp.eq.f32.partialorder %v1152, 8.507059e+37
    %v1154 = vand.u32 %v983, 2147483648
    %v1155 = vor.u32 1.1754944e-38, %v1154
    %v1156 = vsel %vm1153, %v1155, %v1151
    %v1157 = vmul.f32 1.0, %v1156
    %v1158 = vrcp.pop %v984
    %v1159 = vmul.f32 %v984, %v1158
    %v1160 = vsub.f32 1.0, %v1159
    %v1161 = vmul.f32 %v1158, %v1160
    %v1162 = vadd.f32 %v1158, %v1161
    %vm1163 = vweird.f32 %v984
    %vm1164 = vweird.f32 %v1158
    %vm1165 = vmor %vm1163, %vm1164
    %v1166 = vsel %vm1165, %v1158, %v1162
    %v1167 = vand.u32 2147483647, %v984
    %vm1168 = vcmp.eq.f32.partialorder %v1167, 8.507059e+37
    %v1169 = vand.u32 %v984, 2147483648
    %v1170 = vor.u32 1.1754944e-38, %v1169
    %v1171 = vsel %vm1168, %v1170, %v1166
    %v1172 = vmul.f32 1.0, %v1171
    %v1173 = vrcp.pop %v985
    %v1174 = vmul.f32 %v985, %v1173
    %v1175 = vsub.f32 1.0, %v1174
    %v1176 = vmul.f32 %v1173, %v1175
    %v1177 = vadd.f32 %v1173, %v1176
    %vm1178 = vweird.f32 %v985
    %vm1179 = vweird.f32 %v1173
    %vm1180 = vmor %vm1178, %vm1179
    %v1181 = vsel %vm1180, %v1173, %v1177
    %v1182 = vand.u32 2147483647, %v985
    %vm1183 = vcmp.eq.f32.partialorder %v1182, 8.507059e+37
    %v1184 = vand.u32 %v985, 2147483648
    %v1185 = vor.u32 1.1754944e-38, %v1184
    %v1186 = vsel %vm1183, %v1185, %v1181
    %v1187 = vmul.f32 1.0, %v1186
    %v1188 = vrcp.pop %v986
    %v1189 = vmul.f32 %v986, %v1188
    %v1190 = vsub.f32 1.0, %v1189
    %v1191 = vmul.f32 %v1188, %v1190
    %v1192 = vadd.f32 %v1188, %v1191
    %vm1193 = vweird.f32 %v986
    %vm1194 = vweird.f32 %v1188
    %vm1195 = vmor %vm1193, %vm1194
    %v1196 = vsel %vm1195, %v1188, %v1192
    %v1197 = vand.u32 2147483647, %v986
    %vm1198 = vcmp.eq.f32.partialorder %v1197, 8.507059e+37
    %v1199 = vand.u32 %v986, 2147483648
    %v1200 = vor.u32 1.1754944e-38, %v1199
    %v1201 = vsel %vm1198, %v1200, %v1196
    %v1202 = vmul.f32 1.0, %v1201
    %v1203 = vrcp.pop %v987
    %v1204 = vmul.f32 %v987, %v1203
    %v1205 = vsub.f32 1.0, %v1204
    %v1206 = vmul.f32 %v1203, %v1205
    %v1207 = vadd.f32 %v1203, %v1206
    %vm1208 = vweird.f32 %v987
    %vm1209 = vweird.f32 %v1203
    %vm1210 = vmor %vm1208, %vm1209
    %v1211 = vsel %vm1210, %v1203, %v1207
    %v1212 = vand.u32 2147483647, %v987
    %vm1213 = vcmp.eq.f32.partialorder %v1212, 8.507059e+37
    %v1214 = vand.u32 %v987, 2147483648
    %v1215 = vor.u32 1.1754944e-38, %v1214
    %v1216 = vsel %vm1213, %v1215, %v1211
    %v1217 = vmul.f32 1.0, %v1216
    %v1218 = vrcp.pop %v988
    %v1219 = vmul.f32 %v988, %v1218
    %v1220 = vsub.f32 1.0, %v1219
    %v1221 = vmul.f32 %v1218, %v1220
    %v1222 = vadd.f32 %v1218, %v1221
    %vm1223 = vweird.f32 %v988
    %vm1224 = vweird.f32 %v1218
    %vm1225 = vmor %vm1223, %vm1224
    %v1226 = vsel %vm1225, %v1218, %v1222
    %v1227 = vand.u32 2147483647, %v988
    %vm1228 = vcmp.eq.f32.partialorder %v1227, 8.507059e+37
    %v1229 = vand.u32 %v988, 2147483648
    %v1230 = vor.u32 1.1754944e-38, %v1229
    %v1231 = vsel %vm1228, %v1230, %v1226
    %v1232 = vmul.f32 1.0, %v1231
    %v1233 = vrcp.pop %v989
    %v1234 = vmul.f32 %v989, %v1233
    %v1235 = vsub.f32 1.0, %v1234
    %v1236 = vmul.f32 %v1233, %v1235
    %v1237 = vadd.f32 %v1233, %v1236
    %vm1238 = vweird.f32 %v989
    %vm1239 = vweird.f32 %v1233
    %vm1240 = vmor %vm1238, %vm1239
    %v1241 = vsel %vm1240, %v1233, %v1237
    %v1242 = vand.u32 2147483647, %v989
    %vm1243 = vcmp.eq.f32.partialorder %v1242, 8.507059e+37
    %v1244 = vand.u32 %v989, 2147483648
    %v1245 = vor.u32 1.1754944e-38, %v1244
    %v1246 = vsel %vm1243, %v1245, %v1241
    %v1247 = vmul.f32 1.0, %v1246
    %v1248 = vrcp.pop %v990
    %v1249 = vmul.f32 %v990, %v1248
    %v1250 = vsub.f32 1.0, %v1249
    %v1251 = vmul.f32 %v1248, %v1250
    %v1252 = vadd.f32 %v1248, %v1251
    %vm1253 = vweird.f32 %v990
    %vm1254 = vweird.f32 %v1248
    %vm1255 = vmor %vm1253, %vm1254
    %v1256 = vsel %vm1255, %v1248, %v1252
    %v1257 = vand.u32 2147483647, %v990
    %vm1258 = vcmp.eq.f32.partialorder %v1257, 8.507059e+37
    %v1259 = vand.u32 %v990, 2147483648
    %v1260 = vor.u32 1.1754944e-38, %v1259
    %v1261 = vsel %vm1258, %v1260, %v1256
    %v1262 = vmul.f32 1.0, %v1261
    %v1263 = vrcp.pop %v991
    %v1264 = vmul.f32 %v991, %v1263
    %v1265 = vsub.f32 1.0, %v1264
    %v1266 = vmul.f32 %v1263, %v1265
    %v1267 = vadd.f32 %v1263, %v1266
    %vm1268 = vweird.f32 %v991
    %vm1269 = vweird.f32 %v1263
    %vm1270 = vmor %vm1268, %vm1269
    %v1271 = vsel %vm1270, %v1263, %v1267
    %v1272 = vand.u32 2147483647, %v991
    %vm1273 = vcmp.eq.f32.partialorder %v1272, 8.507059e+37
    %v1274 = vand.u32 %v991, 2147483648
    %v1275 = vor.u32 1.1754944e-38, %v1274
    %v1276 = vsel %vm1273, %v1275, %v1271
    %v1277 = vmul.f32 1.0, %v1276
    %v1278 = vrcp.pop %v992
    %v1279 = vmul.f32 %v992, %v1278
    %v1280 = vsub.f32 1.0, %v1279
    %v1281 = vmul.f32 %v1278, %v1280
    %v1282 = vadd.f32 %v1278, %v1281
    %vm1283 = vweird.f32 %v992
    %vm1284 = vweird.f32 %v1278
    %vm1285 = vmor %vm1283, %vm1284
    %v1286 = vsel %vm1285, %v1278, %v1282
    %v1287 = vand.u32 2147483647, %v992
    %vm1288 = vcmp.eq.f32.partialorder %v1287, 8.507059e+37
    %v1289 = vand.u32 %v992, 2147483648
    %v1290 = vor.u32 1.1754944e-38, %v1289
    %v1291 = vsel %vm1288, %v1290, %v1286
    %v1292 = vmul.f32 1.0, %v1291
    %v1293 = vrcp.pop %v993
    %v1294 = vmul.f32 %v993, %v1293
    %v1295 = vsub.f32 1.0, %v1294
    %v1296 = vmul.f32 %v1293, %v1295
    %v1297 = vadd.f32 %v1293, %v1296
    %vm1298 = vweird.f32 %v993
    %vm1299 = vweird.f32 %v1293
    %vm1300 = vmor %vm1298, %vm1299
    %v1301 = vsel %vm1300, %v1293, %v1297
    %v1302 = vand.u32 2147483647, %v993
    %vm1303 = vcmp.eq.f32.partialorder %v1302, 8.507059e+37
    %v1304 = vand.u32 %v993, 2147483648
    %v1305 = vor.u32 1.1754944e-38, %v1304
    %v1306 = vsel %vm1303, %v1305, %v1301
    %v1307 = vmul.f32 1.0, %v1306
    %v1308 = vrcp.pop %v994
    %v1309 = vmul.f32 %v994, %v1308
    %v1310 = vsub.f32 1.0, %v1309
    %v1311 = vmul.f32 %v1308, %v1310
    %v1312 = vadd.f32 %v1308, %v1311
    %vm1313 = vweird.f32 %v994
    %vm1314 = vweird.f32 %v1308
    %vm1315 = vmor %vm1313, %vm1314
    %v1316 = vsel %vm1315, %v1308, %v1312
    %v1317 = vand.u32 2147483647, %v994
    %vm1318 = vcmp.eq.f32.partialorder %v1317, 8.507059e+37
    %v1319 = vand.u32 %v994, 2147483648
    %v1320 = vor.u32 1.1754944e-38, %v1319
    %v1321 = vsel %vm1318, %v1320, %v1316
    %v1322 = vmul.f32 1.0, %v1321
    %v1323 = vrcp.pop %v995
    %v1324 = vmul.f32 %v995, %v1323
    %v1325 = vsub.f32 1.0, %v1324
    %v1326 = vmul.f32 %v1323, %v1325
    %v1327 = vadd.f32 %v1323, %v1326
    %vm1328 = vweird.f32 %v995
    %vm1329 = vweird.f32 %v1323
    %vm1330 = vmor %vm1328, %vm1329
    %v1331 = vsel %vm1330, %v1323, %v1327
    %v1332 = vand.u32 2147483647, %v995
    %vm1333 = vcmp.eq.f32.partialorder %v1332, 8.507059e+37
    %v1334 = vand.u32 %v995, 2147483648
    %v1335 = vor.u32 1.1754944e-38, %v1334
    %v1336 = vsel %vm1333, %v1335, %v1331
    %v1337 = vmul.f32 1.0, %v1336
    %v1338 = vrcp.pop %v996
    %v1339 = vmul.f32 %v996, %v1338
    %v1340 = vsub.f32 1.0, %v1339
    %v1341 = vmul.f32 %v1338, %v1340
    %v1342 = vadd.f32 %v1338, %v1341
    %vm1343 = vweird.f32 %v996
    %vm1344 = vweird.f32 %v1338
    %vm1345 = vmor %vm1343, %vm1344
    %v1346 = vsel %vm1345, %v1338, %v1342
    %v1347 = vand.u32 2147483647, %v996
    %vm1348 = vcmp.eq.f32.partialorder %v1347, 8.507059e+37
    %v1349 = vand.u32 %v996, 2147483648
    %v1350 = vor.u32 1.1754944e-38, %v1349
    %v1351 = vsel %vm1348, %v1350, %v1346
    %v1352 = vmul.f32 1.0, %v1351
    %v1353 = vrcp.pop %v997
    %v1354 = vmul.f32 %v997, %v1353
    %v1355 = vsub.f32 1.0, %v1354
    %v1356 = vmul.f32 %v1353, %v1355
    %v1357 = vadd.f32 %v1353, %v1356
    %vm1358 = vweird.f32 %v997
    %vm1359 = vweird.f32 %v1353
    %vm1360 = vmor %vm1358, %vm1359
    %v1361 = vsel %vm1360, %v1353, %v1357
    %v1362 = vand.u32 2147483647, %v997
    %vm1363 = vcmp.eq.f32.partialorder %v1362, 8.507059e+37
    %v1364 = vand.u32 %v997, 2147483648
    %v1365 = vor.u32 1.1754944e-38, %v1364
    %v1366 = vsel %vm1363, %v1365, %v1361
    %v1367 = vmul.f32 1.0, %v1366
    %v1368 = vrcp.pop %v998
    %v1369 = vmul.f32 %v998, %v1368
    %v1370 = vsub.f32 1.0, %v1369
    %v1371 = vmul.f32 %v1368, %v1370
    %v1372 = vadd.f32 %v1368, %v1371
    %vm1373 = vweird.f32 %v998
    %vm1374 = vweird.f32 %v1368
    %vm1375 = vmor %vm1373, %vm1374
    %v1376 = vsel %vm1375, %v1368, %v1372
    %v1377 = vand.u32 2147483647, %v998
    %vm1378 = vcmp.eq.f32.partialorder %v1377, 8.507059e+37
    %v1379 = vand.u32 %v998, 2147483648
    %v1380 = vor.u32 1.1754944e-38, %v1379
    %v1381 = vsel %vm1378, %v1380, %v1376
    %v1382 = vmul.f32 1.0, %v1381
    %v1383 = vrcp.pop %v999
    %v1384 = vmul.f32 %v999, %v1383
    %v1385 = vsub.f32 1.0, %v1384
    %v1386 = vmul.f32 %v1383, %v1385
    %v1387 = vadd.f32 %v1383, %v1386
    %vm1388 = vweird.f32 %v999
    %vm1389 = vweird.f32 %v1383
    %vm1390 = vmor %vm1388, %vm1389
    %v1391 = vsel %vm1390, %v1383, %v1387
    %v1392 = vand.u32 2147483647, %v999
    %vm1393 = vcmp.eq.f32.partialorder %v1392, 8.507059e+37
    %v1394 = vand.u32 %v999, 2147483648
    %v1395 = vor.u32 1.1754944e-38, %v1394
    %v1396 = vsel %vm1393, %v1395, %v1391
    %v1397 = vmul.f32 1.0, %v1396
    %v1398 = vrcp.pop %v1000
    %v1399 = vmul.f32 %v1000, %v1398
    %v1400 = vsub.f32 1.0, %v1399
    %v1401 = vmul.f32 %v1398, %v1400
    %v1402 = vadd.f32 %v1398, %v1401
    %vm1403 = vweird.f32 %v1000
    %vm1404 = vweird.f32 %v1398
    %vm1405 = vmor %vm1403, %vm1404
    %v1406 = vsel %vm1405, %v1398, %v1402
    %v1407 = vand.u32 2147483647, %v1000
    %vm1408 = vcmp.eq.f32.partialorder %v1407, 8.507059e+37
    %v1409 = vand.u32 %v1000, 2147483648
    %v1410 = vor.u32 1.1754944e-38, %v1409
    %v1411 = vsel %vm1408, %v1410, %v1406
    %v1412 = vmul.f32 1.0, %v1411
    %v1413 = vrcp.pop %v1001
    %v1414 = vmul.f32 %v1001, %v1413
    %v1415 = vsub.f32 1.0, %v1414
    %v1416 = vmul.f32 %v1413, %v1415
    %v1417 = vadd.f32 %v1413, %v1416
    %vm1418 = vweird.f32 %v1001
    %vm1419 = vweird.f32 %v1413
    %vm1420 = vmor %vm1418, %vm1419
    %v1421 = vsel %vm1420, %v1413, %v1417
    %v1422 = vand.u32 2147483647, %v1001
    %vm1423 = vcmp.eq.f32.partialorder %v1422, 8.507059e+37
    %v1424 = vand.u32 %v1001, 2147483648
    %v1425 = vor.u32 1.1754944e-38, %v1424
    %v1426 = vsel %vm1423, %v1425, %v1421
    %v1427 = vmul.f32 1.0, %v1426
    %v1428 = vrcp.pop %v1002
    %v1429 = vmul.f32 %v1002, %v1428
    %v1430 = vsub.f32 1.0, %v1429
    %v1431 = vmul.f32 %v1428, %v1430
    %v1432 = vadd.f32 %v1428, %v1431
    %vm1433 = vweird.f32 %v1002
    %vm1434 = vweird.f32 %v1428
    %vm1435 = vmor %vm1433, %vm1434
    %v1436 = vsel %vm1435, %v1428, %v1432
    %v1437 = vand.u32 2147483647, %v1002
    %vm1438 = vcmp.eq.f32.partialorder %v1437, 8.507059e+37
    %v1439 = vand.u32 %v1002, 2147483648
    %v1440 = vor.u32 1.1754944e-38, %v1439
    %v1441 = vsel %vm1438, %v1440, %v1436
    %v1442 = vmul.f32 1.0, %v1441
    %v1443 = vrcp.pop %v1003
    %v1444 = vmul.f32 %v1003, %v1443
    %v1445 = vsub.f32 1.0, %v1444
    %v1446 = vmul.f32 %v1443, %v1445
    %v1447 = vadd.f32 %v1443, %v1446
    %vm1448 = vweird.f32 %v1003
    %vm1449 = vweird.f32 %v1443
    %vm1450 = vmor %vm1448, %vm1449
    %v1451 = vsel %vm1450, %v1443, %v1447
    %v1452 = vand.u32 2147483647, %v1003
    %vm1453 = vcmp.eq.f32.partialorder %v1452, 8.507059e+37
    %v1454 = vand.u32 %v1003, 2147483648
    %v1455 = vor.u32 1.1754944e-38, %v1454
    %v1456 = vsel %vm1453, %v1455, %v1451
    %v1457 = vmul.f32 1.0, %v1456
    %v1458 = vrcp.pop %v1004
    %v1459 = vmul.f32 %v1004, %v1458
    %v1460 = vsub.f32 1.0, %v1459
    %v1461 = vmul.f32 %v1458, %v1460
    %v1462 = vadd.f32 %v1458, %v1461
    %vm1463 = vweird.f32 %v1004
    %vm1464 = vweird.f32 %v1458
    %vm1465 = vmor %vm1463, %vm1464
    %v1466 = vsel %vm1465, %v1458, %v1462
    %v1467 = vand.u32 2147483647, %v1004
    %vm1468 = vcmp.eq.f32.partialorder %v1467, 8.507059e+37
    %v1469 = vand.u32 %v1004, 2147483648
    %v1470 = vor.u32 1.1754944e-38, %v1469
    %v1471 = vsel %vm1468, %v1470, %v1466
    %v1472 = vmul.f32 1.0, %v1471
    %v1473 = vrcp.pop %v1005
    %v1474 = vmul.f32 %v1005, %v1473
    %v1475 = vsub.f32 1.0, %v1474
    %v1476 = vmul.f32 %v1473, %v1475
    %v1477 = vadd.f32 %v1473, %v1476
    %vm1478 = vweird.f32 %v1005
    %vm1479 = vweird.f32 %v1473
    %vm1480 = vmor %vm1478, %vm1479
    %v1481 = vsel %vm1480, %v1473, %v1477
    %v1482 = vand.u32 2147483647, %v1005
    %vm1483 = vcmp.eq.f32.partialorder %v1482, 8.507059e+37
    %v1484 = vand.u32 %v1005, 2147483648
    %v1485 = vor.u32 1.1754944e-38, %v1484
    %v1486 = vsel %vm1483, %v1485, %v1481
    %v1487 = vmul.f32 1.0, %v1486
    %v1488 = vrcp.pop %v1006
    %v1489 = vmul.f32 %v1006, %v1488
    %v1490 = vsub.f32 1.0, %v1489
    %v1491 = vmul.f32 %v1488, %v1490
    %v1492 = vadd.f32 %v1488, %v1491
    %vm1493 = vweird.f32 %v1006
    %vm1494 = vweird.f32 %v1488
    %vm1495 = vmor %vm1493, %vm1494
    %v1496 = vsel %vm1495, %v1488, %v1492
    %v1497 = vand.u32 2147483647, %v1006
    %vm1498 = vcmp.eq.f32.partialorder %v1497, 8.507059e+37
    %v1499 = vand.u32 %v1006, 2147483648
    %v1500 = vor.u32 1.1754944e-38, %v1499
    %v1501 = vsel %vm1498, %v1500, %v1496
    %v1502 = vmul.f32 1.0, %v1501
    %v1503 = vrcp.pop %v1007
    %v1504 = vmul.f32 %v1007, %v1503
    %v1505 = vsub.f32 1.0, %v1504
    %v1506 = vmul.f32 %v1503, %v1505
    %v1507 = vadd.f32 %v1503, %v1506
    %vm1508 = vweird.f32 %v1007
    %vm1509 = vweird.f32 %v1503
    %vm1510 = vmor %vm1508, %vm1509
    %v1511 = vsel %vm1510, %v1503, %v1507
    %v1512 = vand.u32 2147483647, %v1007
    %vm1513 = vcmp.eq.f32.partialorder %v1512, 8.507059e+37
    %v1514 = vand.u32 %v1007, 2147483648
    %v1515 = vor.u32 1.1754944e-38, %v1514
    %v1516 = vsel %vm1513, %v1515, %v1511
    %v1517 = vmul.f32 1.0, %v1516
    %1518 = vst [vmem:[#allocation2] sm:$0xff] %v1022
    %1519 = vst [vmem:[#allocation2 + $0x8] sm:$0xff] %v1037
    %1520 = vst [vmem:[#allocation2 + $0x10] sm:$0xff] %v1052
    %1521 = vst [vmem:[#allocation2 + $0x18] sm:$0xff] %v1067
    %1522 = vst [vmem:[#allocation2 + $0x20] sm:$0xff] %v1082
    %1523 = vst [vmem:[#allocation2 + $0x28] sm:$0xff] %v1097
    %1524 = vst [vmem:[#allocation2 + $0x30] sm:$0xff] %v1112
    %1525 = vst [vmem:[#allocation2 + $0x38] sm:$0xff] %v1127
    %1526 = vst [vmem:[#allocation2 + $0x40] sm:$0xff] %v1142
    %1527 = vst [vmem:[#allocation2 + $0x48] sm:$0xff] %v1157
    %1528 = vst [vmem:[#allocation2 + $0x50] sm:$0xff] %v1172
    %1529 = vst [vmem:[#allocation2 + $0x58] sm:$0xff] %v1187
    %1530 = vst [vmem:[#allocation2 + $0x60] sm:$0xff] %v1202
    %1531 = vst [vmem:[#allocation2 + $0x68] sm:$0xff] %v1217
    %1532 = vst [vmem:[#allocation2 + $0x70] sm:$0xff] %v1232
    %1533 = vst [vmem:[#allocation2 + $0x78] sm:$0xff] %v1247
    %1534 = vst [vmem:[#allocation2 + $0x80] sm:$0xff] %v1262
    %1535 = vst [vmem:[#allocation2 + $0x88] sm:$0xff] %v1277
    %1536 = vst [vmem:[#allocation2 + $0x90] sm:$0xff] %v1292
    %1537 = vst [vmem:[#allocation2 + $0x98] sm:$0xff] %v1307
    %1538 = vst [vmem:[#allocation2 + $0xa0] sm:$0xff] %v1322
    %1539 = vst [vmem:[#allocation2 + $0xa8] sm:$0xff] %v1337
    %1540 = vst [vmem:[#allocation2 + $0xb0] sm:$0xff] %v1352
    %1541 = vst [vmem:[#allocation2 + $0xb8] sm:$0xff] %v1367
    %1542 = vst [vmem:[#allocation2 + $0xc0] sm:$0xff] %v1382
    %1543 = vst [vmem:[#allocation2 + $0xc8] sm:$0xff] %v1397
    %1544 = vst [vmem:[#allocation2 + $0xd0] sm:$0xff] %v1412
    %1545 = vst [vmem:[#allocation2 + $0xd8] sm:$0xff] %v1427
    %1546 = vst [vmem:[#allocation2 + $0xe0] sm:$0xff] %v1442
    %1547 = vst [vmem:[#allocation2 + $0xe8] sm:$0xff] %v1457
    %1548 = vst [vmem:[#allocation2 + $0xf0] sm:$0xff] %v1472
    %1549 = vst [vmem:[#allocation2 + $0xf8] sm:$0xff] %v1487
    %1550 = vst [vmem:[#allocation2 + $0x100] sm:$0xff] %v1502
    %1551 = vst [vmem:[#allocation2 + $0x108] sm:$0xff] %v1517
    // Predicated region
    $region22: #{mat_lstm_gate_2.1} parent=1 // pred_check
      _
    $region23: #{mat_lstm_gate_2.1} parent=1 // pred_check_branch
      %1553 = sbr.rel (0) target = $region25
    $region24: #{mat_lstm_gate_2.1} parent=1 // pred_region
      %1555 = vsyncadd [#allocation3], 0
      %s1556 = sshll.u32 [#allocation2], 4
      %s1557 = int_to_ptr.vmem [resolvable:$true] %s1556
      %s1558 = sshll.u32 %s5, 4
      %s1559 = int_to_ptr.hbm [resolvable:$true] %s1558
      %1564 = dma.vmem_to_hbm [thread:$0]  %s1557, 4352, %s1559, [#allocation3], 256, 256, 16
    $region25: #{mat_lstm_gate_2.1} parent=1 // pred_fallthru
      _
    // Predicated region
    $region26: #{mat_lstm_gate_2.1} parent=1 // pred_check
      _
    $region27: #{mat_lstm_gate_2.1} parent=1 // pred_check_branch
      %1566 = sbr.rel (0) target = $region29
    $region28: #{mat_lstm_gate_2.1} parent=1 // pred_region
      %1568 = dma.done [#allocation3], 4352
    $region29: #{mat_lstm_gate_2.1} parent=1 // pred_fallthru
      _
    %1569 = vsyncpa [#allocation3], 1

</llo_original>
